<compile_context>
chip_gen: v7x
topology: tpu7x:2x2x1
jax: 0.10.0
libtpu: 0.0.40
codegen_flags: <defaults>
</compile_context>

<pallas_src>
import functools

import jax
import jax.numpy as jnp
from jax.experimental import pallas as pl
from jax.experimental.pallas import tpu as pltpu


def _round_up(n, m):
    return ((n + m - 1) // m) * m


def _vmem_limit_bytes():
    """Per-generation scoped-VMEM budget (v7x has 64 MiB/TC, v5e/v6e 128 MiB)."""
    cap = 128 * 1024 * 1024
    try:
        cap = int(getattr(pltpu.get_tpu_info(), "vmem_capacity_bytes", cap))
    except Exception:
        pass
    return max(32 * 1024 * 1024, min(cap - 16 * 1024 * 1024, 100 * 1024 * 1024))


def _pick_tv(h, tm, vocab_size, vmem_limit):
    """Vocab tile size: big enough to amortize per-step overhead, capped so the
    double-buffered bf16 weight tile + f32 logits intermediate fit in ~half of
    the per-chip VMEM budget."""
    per_tv = 2 * h * 2 + tm * 4          # 2 weight buffers (bf16) + logits (f32)
    tv = (int(vmem_limit * 0.5) // per_tv) // 128 * 128
    tv = max(128, min(tv, 2048))
    return min(tv, _round_up(vocab_size + 1, 128))


# ----------------------------- Pallas kernel ------------------------------- #
def actor_critic_kernel(tgt_ref, x_ref, wh_ref, bh_ref, wlm_ref,
                        logp_ref, val_ref,
                        h_sc, m_sc, l_sc, t_sc, v_sc,
                        *, vocab_size, tv):
    # tgt_ref: (1, tm)      int32 next-token ids (lane-dense)
    # x_ref:   (H_in, tm)   embedded tokens, transposed, bf16
    # wh_ref:  (H, H_in)    synthetic backbone dense (transposed), bf16
    # bh_ref:  (H, 1)       backbone bias, f32
    # wlm_ref: (tv, H)      one vocab tile of the fused [lm_head ; critic] weight, bf16
    # logp/val outputs: (1, tm) f32, written once at the last vocab tile
    # scratch: h_sc (H, tm) bf16; m/l/t/v (1, tm) f32 running stats
    v_idx = pl.program_id(1)
    last_v = pl.num_programs(1) - 1
    is_last = v_idx == last_v

    @pl.when(v_idx == 0)
    def _init():
        # Backbone hidden state computed once per row tile, cached in bf16.
        h = jnp.tanh(
            jnp.dot(wh_ref[...], x_ref[...], preferred_element_type=jnp.float32)
            + bh_ref[...])
        h_sc[...] = h.astype(h_sc.dtype)
        m_sc[...] = jnp.full_like(m_sc, -jnp.inf)
        l_sc[...] = jnp.zeros_like(l_sc)
        t_sc[...] = jnp.zeros_like(t_sc)
        v_sc[...] = jnp.zeros_like(v_sc)

    # lm_head tile (critic row fused into the last tile): logits_T (tv, tm).
    logits = jnp.dot(wlm_ref[...], h_sc[...], preferred_element_type=jnp.float32)

    col0 = v_idx * tv
    # Tile-local sublane index; compared against (1, tm)/scalar offsets so no
    # full-tile "+ col0" pass is ever issued.
    local_ids = jax.lax.broadcasted_iota(jnp.int32, logits.shape, 0)
    # Ones row vector: sublane sums are offloaded to the MXU (free slot).
    ones_row = jnp.ones((1, tv), jnp.bfloat16)

    def lse_update(logits_sm):
        m_tile = jnp.max(logits_sm, axis=0, keepdims=True)          # (1, tm)
        m_new = jnp.maximum(m_sc[...], m_tile)
        alpha = jnp.exp(m_sc[...] - m_new)
        p = jnp.exp(logits_sm - m_new)                               # exp(-inf)=0 on pad
        p_sum = jnp.dot(ones_row, p.astype(jnp.bfloat16),
                        preferred_element_type=jnp.float32)          # MXU sublane sum
        l_sc[...] = alpha * l_sc[...] + p_sum
        m_sc[...] = m_new

    # Fast path: interior vocab tiles hold only real vocab columns -> no mask.
    @pl.when(v_idx != last_v)
    def _interior():
        lse_update(logits)

    # Slow path: the last tile holds the fused critic row and any pad rows.
    # (NaN only possible if vocab_size <= 0, i.e. the whole first tile masked.)
    @pl.when(is_last)
    def _last():
        n_valid = vocab_size - col0          # tile-local count of real vocab rows
        lse_update(jnp.where(local_ids < n_valid, logits, -jnp.inf))
        crit = jnp.where(local_ids == n_valid, logits, 0.0)
        v_sc[...] += jnp.dot(ones_row, crit.astype(jnp.bfloat16),
                             preferred_element_type=jnp.float32)

    # Gathered target logit (target lives in exactly one vocab tile per lane).
    t_hit = jnp.where(local_ids == (tgt_ref[...] - col0), logits, 0.0)
    t_sc[...] += jnp.dot(ones_row, t_hit.astype(jnp.bfloat16),
                         preferred_element_type=jnp.float32)

    @pl.when(is_last)
    def _finalize():
        lse = m_sc[...] + jnp.log(l_sc[...])
        logp_ref[...] = t_sc[...] - lse
        val_ref[...] = v_sc[...]


def _pallas_heads(x_t, tgt, wh_t, bh_t, w_fused, *, vocab_size, tm, tv,
                  vmem_limit_bytes):
    h_in, n_rows_pad = x_t.shape
    h = wh_t.shape[0]
    v_pad = w_fused.shape[0]
    assert n_rows_pad % tm == 0 and tm % 128 == 0
    assert v_pad % tv == 0 and tv % 8 == 0
    grid = (n_rows_pad // tm, v_pad // tv)

    kernel = functools.partial(actor_critic_kernel, vocab_size=vocab_size, tv=tv)

    logp, val = pl.pallas_call(
        kernel,
        out_shape=(
            jax.ShapeDtypeStruct((1, n_rows_pad), jnp.float32),
            jax.ShapeDtypeStruct((1, n_rows_pad), jnp.float32),
        ),
        grid_spec=pltpu.PrefetchScalarGridSpec(
            num_scalar_prefetch=0,
            grid=grid,
            in_specs=[
                pl.BlockSpec((1, tm), lambda i, v: (0, i)),       # target ids (lane-dense)
                pl.BlockSpec((h_in, tm), lambda i, v: (0, i)),    # x^T, tokens on lanes
                pl.BlockSpec((h, h_in), lambda i, v: (0, 0)),     # Wh^T (resident)
                pl.BlockSpec((h, 1), lambda i, v: (0, 0)),        # bh^T (resident)
                pl.BlockSpec((tv, h), lambda i, v: (v, 0)),       # fused lm/critic tile
            ],
            out_specs=[
                pl.BlockSpec((1, tm), lambda i, v: (0, i)),       # log-probs (lane-dense)
                pl.BlockSpec((1, tm), lambda i, v: (0, i)),       # values    (lane-dense)
            ],
            scratch_shapes=[
                pltpu.VMEM((h, tm), jnp.bfloat16),   # cached hidden state
                pltpu.VMEM((1, tm), jnp.float32),    # running max
                pltpu.VMEM((1, tm), jnp.float32),    # running sum-exp
                pltpu.VMEM((1, tm), jnp.float32),    # gathered target logit
                pltpu.VMEM((1, tm), jnp.float32),    # critic value
            ],
        ),
        compiler_params=pltpu.CompilerParams(
            dimension_semantics=("parallel", "arbitrary"),
            vmem_limit_bytes=vmem_limit_bytes,
        ),
    )(tgt, x_t, wh_t, bh_t, w_fused)
    return logp, val


# ----------------------------- Python wrapper ------------------------------ #
def actor_critic_forward(sequences, attention_mask, num_actions, params, *,
                         tm=512, tv=None):
    """Mirrors ActorCritic.forward(sequences, num_actions, attention_mask).

    Returns (log_probs[:, -num_actions:], value[:, -num_actions:]).
    """
    B, S = sequences.shape
    vocab_size, h_in = params["tok_emb"].shape
    h = params["wh"].shape[1]

    # position_ids = attention_mask.cumsum(-1) - 1 ; masked_fill(mask==0, 1)
    position_ids = jnp.cumsum(attention_mask.astype(jnp.int32), axis=-1) - 1
    position_ids = jnp.where(attention_mask == 0, 1, position_ids)

    # Synthetic backbone embedding (glue: gathers stay in XLA)
    x = params["tok_emb"][sequences] + params["pos_emb"][position_ids]   # (B,S,Hin)

    # Targets: token at t+1 predicted from position t (last position is dummy 0,
    # sliced off below — matches logits[:, :-1, :] vs sequences[:, 1:]).
    targets = jnp.concatenate(
        [sequences[:, 1:], jnp.zeros((B, 1), dtype=sequences.dtype)], axis=1)

    n_rows = B * S

    # Keep >= 2 row tiles when possible so both TensorCores get work on the
    # megacore-sharded ("parallel") row axis (matters for small batches / v7x).
    rows128 = _round_up(n_rows, 128)
    if tm > 128 and rows128 // tm < 2:
        tm = max(128, (rows128 // 2) // 128 * 128)
    assert tm % 128 == 0

    vmem_limit = _vmem_limit_bytes()
    if tv is None:
        tv = _pick_tv(h, tm, vocab_size, vmem_limit)

    n_rows_pad = _round_up(n_rows, tm)
    v_pad = _round_up(vocab_size + 1, tv)            # +1: fused critic row

    # Activations transposed (tokens on lanes); cast to bf16 BEFORE pad/transpose
    # so the wrapper-side plumbing moves half the bytes.
    x_flat = x.reshape(n_rows, h_in).astype(jnp.bfloat16)
    x_flat = jnp.pad(x_flat, ((0, n_rows_pad - n_rows), (0, 0)))
    x_t = x_flat.T                                                        # (Hin, Np)

    tgt = jnp.pad(targets.reshape(n_rows), (0, n_rows_pad - n_rows))
    tgt = tgt.reshape(1, n_rows_pad).astype(jnp.int32)

    # Weights in transposed layout; critic head fused as one extra row.
    # Built directly in bf16 (no (V_pad, H) f32 materialization per call).
    # TODO(synk): in a training loop the fused weight should be built once and
    # cached across forward calls rather than re-concatenated here.
    wh_t = params["wh"].T.astype(jnp.bfloat16)                            # (H, Hin)
    bh_t = params["bh"].reshape(h, 1).astype(jnp.float32)                 # (H, 1)
    w_fused = jnp.concatenate(
        [params["wlm"].T.astype(jnp.bfloat16),                            # (V, H)
         params["wv"].T.astype(jnp.bfloat16),                             # (1, H)
         jnp.zeros((v_pad - vocab_size - 1, h), jnp.bfloat16)], axis=0)

    logp_row, val_row = _pallas_heads(x_t, tgt, wh_t, bh_t, w_fused,
                                      vocab_size=vocab_size, tm=tm, tv=tv,
                                      vmem_limit_bytes=vmem_limit)

    log_probs = logp_row[0, :n_rows].reshape(B, S)[:, :-1]                # (B, S-1)
    value = (val_row[0, :n_rows] + params["bv"][0, 0]).reshape(B, S)[:, :-1]
    return log_probs[:, -num_actions:], value[:, -num_actions:]


# ------------------------- pure-JAX reference check ------------------------ #
def _reference(sequences, attention_mask, num_actions, params):
    B, S = sequences.shape
    position_ids = jnp.cumsum(attention_mask.astype(jnp.int32), axis=-1) - 1
    position_ids = jnp.where(attention_mask == 0, 1, position_ids)
    x = params["tok_emb"][sequences] + params["pos_emb"][position_ids]

    def b(a):  # emulate the bf16 rounding of the kernel's MXU inputs
        return a.astype(jnp.bfloat16).astype(jnp.float32)

    h = jnp.tanh(jnp.einsum("bsi,ih->bsh", b(x), b(params["wh"])) + params["bh"])
    hb = b(h)
    logits = jnp.einsum("bsh,hv->bsv", hb, b(params["wlm"]))
    logp_all = jax.nn.log_softmax(logits, axis=-1)
    logp = jnp.take_along_axis(logp_all[:, :-1, :],
                               sequences[:, 1:, None], axis=-1)[..., 0]
    value = (jnp.einsum("bsh,ho->bso", hb, b(params["wv"]))
             + params["bv"][0, 0])[..., 0][:, :-1]
    return logp[:, -num_actions:], value[:, -num_actions:]


# ----------------------------------- main ---------------------------------- #
if __name__ == "__main__":
    B, S, H_IN, H, V = 4, 40, 128, 128, 200
    NUM_ACTIONS = 8
    TM, TV = 128, 128   # small tiles so the toy test exercises both grid axes
                        # and both the interior (unmasked) and last-tile paths

    key = jax.random.PRNGKey(0)
    k1, k2, k3, k4, k5, k6 = jax.random.split(key, 6)

    params = {
        "tok_emb": jax.random.normal(k1, (V, H_IN), jnp.float32) * 0.1,
        "pos_emb": jax.random.normal(k2, (S, H_IN), jnp.float32) * 0.1,
        "wh": jax.random.normal(k3, (H_IN, H), jnp.float32) * 0.1,
        "bh": jnp.zeros((1, H), jnp.float32),
        "wlm": jax.random.normal(k4, (H, V), jnp.float32) * 0.1,
        "wv": jax.random.normal(k5, (H, 1), jnp.float32) * 0.1,
        "bv": jnp.zeros((1, 1), jnp.float32),  # nn.init.zeros_(critic_head.bias)
    }

    sequences = jax.random.randint(k6, (B, S), 0, V, dtype=jnp.int32)
    attention_mask = jnp.ones((B, S), jnp.int32)

    ref_logp, ref_value = _reference(sequences, attention_mask, NUM_ACTIONS, params)

    # 1) explicit small tiles: multi-tile vocab axis (interior fast path + masked
    #    last tile) and two row tiles.
    logp, value = actor_critic_forward(sequences, attention_mask, NUM_ACTIONS,
                                       params, tm=TM, tv=TV)
    jax.block_until_ready((logp, value))
    assert logp.shape == (B, NUM_ACTIONS) and value.shape == (B, NUM_ACTIONS)
    assert jnp.allclose(logp, ref_logp, atol=2e-2, rtol=2e-2)
    assert jnp.allclose(value, ref_value, atol=2e-2, rtol=2e-2)

    # 2) auto-picked tiles (per-chip VMEM budget, single vocab tile path).
    logp2, value2 = actor_critic_forward(sequences, attention_mask, NUM_ACTIONS,
                                         params)
    jax.block_until_ready((logp2, value2))
    assert jnp.allclose(logp2, ref_logp, atol=2e-2, rtol=2e-2)
    assert jnp.allclose(value2, ref_value, atol=2e-2, rtol=2e-2)

    # TODO(synk): the full pretrained HF causal-LM backbone (transformer layers,
    # flash-attn, LoRA/4-bit paths, generate()) is replaced by a synthetic
    # embedding + dense backbone; only the head math (lm_head logits, log-prob
    # gather, fused critic head) is faithful to ActorCritic.forward.
    print("KERNEL_OK")
</pallas_src>

<mosaic_0001>
module attributes {stable_mosaic.version = 11 : i64} {
  func.func @actor_critic_kernel(%arg0: i32, %arg1: i32, %arg2: memref<1x128xi32, #tpu.memory_space<vmem>>, %arg3: memref<128x128xbf16, #tpu.memory_space<vmem>>, %arg4: memref<128x128xbf16, #tpu.memory_space<vmem>>, %arg5: memref<128x1xf32, #tpu.memory_space<vmem>>, %arg6: memref<128x128xbf16, #tpu.memory_space<vmem>>, %arg7: memref<1x128xf32, #tpu.memory_space<vmem>>, %arg8: memref<1x128xf32, #tpu.memory_space<vmem>>, %arg9: memref<128x128xbf16, #tpu.memory_space<vmem>>, %arg10: memref<1x128xf32, #tpu.memory_space<vmem>>, %arg11: memref<1x128xf32, #tpu.memory_space<vmem>>, %arg12: memref<1x128xf32, #tpu.memory_space<vmem>>, %arg13: memref<1x128xf32, #tpu.memory_space<vmem>>) attributes {dimension_semantics = [#tpu.dimension_semantics<parallel>, #tpu.dimension_semantics<arbitrary>], iteration_bounds = array<i64: 2, 2>, scalar_prefetch = 0 : i64, scratch_operands = 5 : i64, tpu.core_type = #tpu.core_type<tc>, window_params = [{transform_indices = @transform_0, window_bounds = array<i64: 1, 128>}, {transform_indices = @transform_1, window_bounds = array<i64: 128, 128>}, {pipeline_mode = #tpu.pipeline_mode<synchronous>, transform_indices = @transform_2, window_bounds = array<i64: 128, 128>}, {pipeline_mode = #tpu.pipeline_mode<synchronous>, transform_indices = @transform_3, window_bounds = array<i64: 128, 1>}, {transform_indices = @transform_4, window_bounds = array<i64: 128, 128>}, {transform_indices = @transform_5, window_bounds = array<i64: 1, 128>}, {transform_indices = @transform_6, window_bounds = array<i64: 1, 128>}]} {
    %c1_i32 = arith.constant 1 : i32
    %0 = arith.cmpi eq, %arg1, %c1_i32 : i32
    %c0_i32 = arith.constant 0 : i32
    %1 = arith.cmpi eq, %arg1, %c0_i32 : i32
    %2 = arith.extui %1 : i1 to i32
    %c0_i32_0 = arith.constant 0 : i32
    %3 = arith.cmpi ne, %2, %c0_i32_0 : i32
    scf.if %3 {
      %c0_17 = arith.constant 0 : index
      %c0_18 = arith.constant 0 : index
      %29 = vector.load %arg4[%c0_17, %c0_18] : memref<128x128xbf16, #tpu.memory_space<vmem>>, vector<128x128xbf16>
      %c0_19 = arith.constant 0 : index
      %c0_20 = arith.constant 0 : index
      %30 = vector.load %arg3[%c0_19, %c0_20] : memref<128x128xbf16, #tpu.memory_space<vmem>>, vector<128x128xbf16>
      %cst_21 = arith.constant dense<0.000000e+00> : vector<128x128xf32>
      %31 = tpu.matmul %29, %30, %cst_21 {dimension_numbers = #tpu.dot_dimension_numbers<[1], [0], [0], [1], [0, 0, 1, 1], [], []>} : vector<128x128xbf16>, vector<128x128xbf16>, vector<128x128xf32> -> vector<128x128xf32>
      %c0_22 = arith.constant 0 : index
      %c0_23 = arith.constant 0 : index
      %32 = vector.load %arg5[%c0_22, %c0_23] : memref<128x1xf32, #tpu.memory_space<vmem>>, vector<128x1xf32>
      %33 = vector.broadcast %32 : vector<128x1xf32> to vector<128x128xf32>
      %34 = arith.addf %31, %33 : vector<128x128xf32>
      %35 = math.tanh %34 : vector<128x128xf32>
      %36 = arith.truncf %35 : vector<128x128xf32> to vector<128x128xbf16>
      %c0_24 = arith.constant 0 : index
      %c0_25 = arith.constant 0 : index
      %37 = vector.load %arg9[%c0_24, %c0_25] : memref<128x128xbf16, #tpu.memory_space<vmem>>, vector<128x128xbf16>
      tpu.vector_store %arg9[%c0_24, %c0_25], %36 {strides = array<i32>} : memref<128x128xbf16, #tpu.memory_space<vmem>>, vector<128x128xbf16>,
      %cst_26 = arith.constant 0xFF800000 : f32
      %38 = vector.broadcast %cst_26 : f32 to vector<1x128xf32>
      %c0_27 = arith.constant 0 : index
      %c0_28 = arith.constant 0 : index
      %39 = vector.load %arg10[%c0_27, %c0_28] : memref<1x128xf32, #tpu.memory_space<vmem>>, vector<1x128xf32>
      tpu.vector_store %arg10[%c0_27, %c0_28], %38 {strides = array<i32>} : memref<1x128xf32, #tpu.memory_space<vmem>>, vector<1x128xf32>,
      %cst_29 = arith.constant 0.000000e+00 : f32
      %40 = vector.broadcast %cst_29 : f32 to vector<1x128xf32>
      %c0_30 = arith.constant 0 : index
      %c0_31 = arith.constant 0 : index
      %41 = vector.load %arg11[%c0_30, %c0_31] : memref<1x128xf32, #tpu.memory_space<vmem>>, vector<1x128xf32>
      tpu.vector_store %arg11[%c0_30, %c0_31], %40 {strides = array<i32>} : memref<1x128xf32, #tpu.memory_space<vmem>>, vector<1x128xf32>,
      %cst_32 = arith.constant 0.000000e+00 : f32
      %42 = vector.broadcast %cst_32 : f32 to vector<1x128xf32>
      %c0_33 = arith.constant 0 : index
      %c0_34 = arith.constant 0 : index
      %43 = vector.load %arg12[%c0_33, %c0_34] : memref<1x128xf32, #tpu.memory_space<vmem>>, vector<1x128xf32>
      tpu.vector_store %arg12[%c0_33, %c0_34], %42 {strides = array<i32>} : memref<1x128xf32, #tpu.memory_space<vmem>>, vector<1x128xf32>,
      %cst_35 = arith.constant 0.000000e+00 : f32
      %44 = vector.broadcast %cst_35 : f32 to vector<1x128xf32>
      %c0_36 = arith.constant 0 : index
      %c0_37 = arith.constant 0 : index
      %45 = vector.load %arg13[%c0_36, %c0_37] : memref<1x128xf32, #tpu.memory_space<vmem>>, vector<1x128xf32>
      tpu.vector_store %arg13[%c0_36, %c0_37], %44 {strides = array<i32>} : memref<1x128xf32, #tpu.memory_space<vmem>>, vector<1x128xf32>,
    } else {
    }
    %c0 = arith.constant 0 : index
    %c0_1 = arith.constant 0 : index
    %4 = vector.load %arg6[%c0, %c0_1] : memref<128x128xbf16, #tpu.memory_space<vmem>>, vector<128x128xbf16>
    %c0_2 = arith.constant 0 : index
    %c0_3 = arith.constant 0 : index
    %5 = vector.load %arg9[%c0_2, %c0_3] : memref<128x128xbf16, #tpu.memory_space<vmem>>, vector<128x128xbf16>
    %cst = arith.constant dense<0.000000e+00> : vector<128x128xf32>
    %6 = tpu.matmul %4, %5, %cst {dimension_numbers = #tpu.dot_dimension_numbers<[1], [0], [0], [1], [0, 0, 1, 1], [], []>} : vector<128x128xbf16>, vector<128x128xbf16>, vector<128x128xf32> -> vector<128x128xf32>
    %c128_i32 = arith.constant 128 : i32
    %7 = arith.muli %arg1, %c128_i32 : i32
    %8 = tpu.iota {dimensions = array<i32: 0>} : vector<128x128xi32>
    %cst_4 = arith.constant 1.000000e+00 : bf16
    %9 = vector.broadcast %cst_4 : bf16 to vector<1x128xbf16>
    %c1_i32_5 = arith.constant 1 : i32
    %10 = arith.cmpi ne, %arg1, %c1_i32_5 : i32
    %11 = arith.extui %10 : i1 to i32
    %c0_i32_6 = arith.constant 0 : i32
    %12 = arith.cmpi ne, %11, %c0_i32_6 : i32
    scf.if %12 {
      %cst_17 = arith.constant dense<0xFF800000> : vector<128xf32>
      %29 = vector.multi_reduction <maximumf>, %6, %cst_17 [0] : vector<128x128xf32> to vector<128xf32>
      %30 = vector.shape_cast %29 : vector<128xf32> to vector<1x128xf32>
      %c0_18 = arith.constant 0 : index
      %c0_19 = arith.constant 0 : index
      %31 = vector.load %arg10[%c0_18, %c0_19] : memref<1x128xf32, #tpu.memory_space<vmem>>, vector<1x128xf32>
      %32 = arith.maximumf %31, %30 : vector<1x128xf32>
      %c0_20 = arith.constant 0 : index
      %c0_21 = arith.constant 0 : index
      %33 = vector.load %arg10[%c0_20, %c0_21] : memref<1x128xf32, #tpu.memory_space<vmem>>, vector<1x128xf32>
      %34 = arith.subf %33, %32 : vector<1x128xf32>
      %35 = math.exp %34 : vector<1x128xf32>
      %36 = vector.broadcast %32 : vector<1x128xf32> to vector<128x128xf32>
      %37 = arith.subf %6, %36 : vector<128x128xf32>
      %38 = math.exp %37 : vector<128x128xf32>
      %39 = arith.truncf %38 : vector<128x128xf32> to vector<128x128xbf16>
      %cst_22 = arith.constant dense<0.000000e+00> : vector<1x128xf32>
      %40 = tpu.matmul %9, %39, %cst_22 {dimension_numbers = #tpu.dot_dimension_numbers<[1], [0], [0], [1], [0, 0, 1, 1], [], []>} : vector<1x128xbf16>, vector<128x128xbf16>, vector<1x128xf32> -> vector<1x128xf32>
      %c0_23 = arith.constant 0 : index
      %c0_24 = arith.constant 0 : index
      %41 = vector.load %arg11[%c0_23, %c0_24] : memref<1x128xf32, #tpu.memory_space<vmem>>, vector<1x128xf32>
      %42 = arith.mulf %35, %41 : vector<1x128xf32>
      %43 = arith.addf %42, %40 : vector<1x128xf32>
      %c0_25 = arith.constant 0 : index
      %c0_26 = arith.constant 0 : index
      %44 = vector.load %arg11[%c0_25, %c0_26] : memref<1x128xf32, #tpu.memory_space<vmem>>, vector<1x128xf32>
      tpu.vector_store %arg11[%c0_25, %c0_26], %43 {strides = array<i32>} : memref<1x128xf32, #tpu.memory_space<vmem>>, vector<1x128xf32>,
      %c0_27 = arith.constant 0 : index
      %c0_28 = arith.constant 0 : index
      %45 = vector.load %arg10[%c0_27, %c0_28] : memref<1x128xf32, #tpu.memory_space<vmem>>, vector<1x128xf32>
      tpu.vector_store %arg10[%c0_27, %c0_28], %32 {strides = array<i32>} : memref<1x128xf32, #tpu.memory_space<vmem>>, vector<1x128xf32>,
    } else {
    }
    %13 = arith.extui %0 : i1 to i32
    %c0_i32_7 = arith.constant 0 : i32
    %14 = arith.cmpi ne, %13, %c0_i32_7 : i32
    scf.if %14 {
      %c200_i32 = arith.constant 200 : i32
      %29 = arith.subi %c200_i32, %7 : i32
      %30 = vector.broadcast %29 : i32 to vector<128x128xi32>
      %31 = arith.cmpi slt, %8, %30 : vector<128x128xi32>
      %cst_17 = arith.constant 0xFF800000 : f32
      %32 = vector.broadcast %cst_17 : f32 to vector<128x128xf32>
      %33 = arith.select %31, %6, %32 : vector<128x128xi1>, vector<128x128xf32>
      %cst_18 = arith.constant dense<0xFF800000> : vector<128xf32>
      %34 = vector.multi_reduction <maximumf>, %33, %cst_18 [0] : vector<128x128xf32> to vector<128xf32>
      %35 = vector.shape_cast %34 : vector<128xf32> to vector<1x128xf32>
      %c0_19 = arith.constant 0 : index
      %c0_20 = arith.constant 0 : index
      %36 = vector.load %arg10[%c0_19, %c0_20] : memref<1x128xf32, #tpu.memory_space<vmem>>, vector<1x128xf32>
      %37 = arith.maximumf %36, %35 : vector<1x128xf32>
      %c0_21 = arith.constant 0 : index
      %c0_22 = arith.constant 0 : index
      %38 = vector.load %arg10[%c0_21, %c0_22] : memref<1x128xf32, #tpu.memory_space<vmem>>, vector<1x128xf32>
      %39 = arith.subf %38, %37 : vector<1x128xf32>
      %40 = math.exp %39 : vector<1x128xf32>
      %41 = vector.broadcast %37 : vector<1x128xf32> to vector<128x128xf32>
      %42 = arith.subf %33, %41 : vector<128x128xf32>
      %43 = math.exp %42 : vector<128x128xf32>
      %44 = arith.truncf %43 : vector<128x128xf32> to vector<128x128xbf16>
      %cst_23 = arith.constant dense<0.000000e+00> : vector<1x128xf32>
      %45 = tpu.matmul %9, %44, %cst_23 {dimension_numbers = #tpu.dot_dimension_numbers<[1], [0], [0], [1], [0, 0, 1, 1], [], []>} : vector<1x128xbf16>, vector<128x128xbf16>, vector<1x128xf32> -> vector<1x128xf32>
      %c0_24 = arith.constant 0 : index
      %c0_25 = arith.constant 0 : index
      %46 = vector.load %arg11[%c0_24, %c0_25] : memref<1x128xf32, #tpu.memory_space<vmem>>, vector<1x128xf32>
      %47 = arith.mulf %40, %46 : vector<1x128xf32>
      %48 = arith.addf %47, %45 : vector<1x128xf32>
      %c0_26 = arith.constant 0 : index
      %c0_27 = arith.constant 0 : index
      %49 = vector.load %arg11[%c0_26, %c0_27] : memref<1x128xf32, #tpu.memory_space<vmem>>, vector<1x128xf32>
      tpu.vector_store %arg11[%c0_26, %c0_27], %48 {strides = array<i32>} : memref<1x128xf32, #tpu.memory_space<vmem>>, vector<1x128xf32>,
      %c0_28 = arith.constant 0 : index
      %c0_29 = arith.constant 0 : index
      %50 = vector.load %arg10[%c0_28, %c0_29] : memref<1x128xf32, #tpu.memory_space<vmem>>, vector<1x128xf32>
      tpu.vector_store %arg10[%c0_28, %c0_29], %37 {strides = array<i32>} : memref<1x128xf32, #tpu.memory_space<vmem>>, vector<1x128xf32>,
      %51 = vector.broadcast %29 : i32 to vector<128x128xi32>
      %52 = arith.cmpi eq, %8, %51 : vector<128x128xi32>
      %cst_30 = arith.constant 0.000000e+00 : f32
      %53 = vector.broadcast %cst_30 : f32 to vector<128x128xf32>
      %54 = arith.select %52, %6, %53 : vector<128x128xi1>, vector<128x128xf32>
      %c0_31 = arith.constant 0 : index
      %c0_32 = arith.constant 0 : index
      %55 = vector.load %arg13[%c0_31, %c0_32] : memref<1x128xf32, #tpu.memory_space<vmem>>, vector<1x128xf32>
      %56 = arith.truncf %54 : vector<128x128xf32> to vector<128x128xbf16>
      %cst_33 = arith.constant dense<0.000000e+00> : vector<1x128xf32>
      %57 = tpu.matmul %9, %56, %cst_33 {dimension_numbers = #tpu.dot_dimension_numbers<[1], [0], [0], [1], [0, 0, 1, 1], [], []>} : vector<1x128xbf16>, vector<128x128xbf16>, vector<1x128xf32> -> vector<1x128xf32>
      %58 = arith.addf %55, %57 : vector<1x128xf32>
      %c0_34 = arith.constant 0 : index
      %c0_35 = arith.constant 0 : index
      %59 = vector.load %arg13[%c0_34, %c0_35] : memref<1x128xf32, #tpu.memory_space<vmem>>, vector<1x128xf32>
      tpu.vector_store %arg13[%c0_34, %c0_35], %58 {strides = array<i32>} : memref<1x128xf32, #tpu.memory_space<vmem>>, vector<1x128xf32>,
    } else {
    }
    %c0_8 = arith.constant 0 : index
    %c0_9 = arith.constant 0 : index
    %15 = vector.load %arg2[%c0_8, %c0_9] : memref<1x128xi32, #tpu.memory_space<vmem>>, vector<1x128xi32>
    %16 = vector.broadcast %7 : i32 to vector<1x128xi32>
    %17 = arith.subi %15, %16 : vector<1x128xi32>
    %18 = vector.broadcast %17 : vector<1x128xi32> to vector<128x128xi32>
    %19 = arith.cmpi eq, %8, %18 : vector<128x128xi32>
    %cst_10 = arith.constant 0.000000e+00 : f32
    %20 = vector.broadcast %cst_10 : f32 to vector<128x128xf32>
    %21 = arith.select %19, %6, %20 : vector<128x128xi1>, vector<128x128xf32>
    %c0_11 = arith.constant 0 : index
    %c0_12 = arith.constant 0 : index
    %22 = vector.load %arg12[%c0_11, %c0_12] : memref<1x128xf32, #tpu.memory_space<vmem>>, vector<1x128xf32>
    %23 = arith.truncf %21 : vector<128x128xf32> to vector<128x128xbf16>
    %cst_13 = arith.constant dense<0.000000e+00> : vector<1x128xf32>
    %24 = tpu.matmul %9, %23, %cst_13 {dimension_numbers = #tpu.dot_dimension_numbers<[1], [0], [0], [1], [0, 0, 1, 1], [], []>} : vector<1x128xbf16>, vector<128x128xbf16>, vector<1x128xf32> -> vector<1x128xf32>
    %25 = arith.addf %22, %24 : vector<1x128xf32>
    %c0_14 = arith.constant 0 : index
    %c0_15 = arith.constant 0 : index
    %26 = vector.load %arg12[%c0_14, %c0_15] : memref<1x128xf32, #tpu.memory_space<vmem>>, vector<1x128xf32>
    tpu.vector_store %arg12[%c0_14, %c0_15], %25 {strides = array<i32>} : memref<1x128xf32, #tpu.memory_space<vmem>>, vector<1x128xf32>,
    %27 = arith.extui %0 : i1 to i32
    %c0_i32_16 = arith.constant 0 : i32
    %28 = arith.cmpi ne, %27, %c0_i32_16 : i32
    scf.if %28 {
      %c0_17 = arith.constant 0 : index
      %c0_18 = arith.constant 0 : index
      %29 = vector.load %arg10[%c0_17, %c0_18] : memref<1x128xf32, #tpu.memory_space<vmem>>, vector<1x128xf32>
      %c0_19 = arith.constant 0 : index
      %c0_20 = arith.constant 0 : index
      %30 = vector.load %arg11[%c0_19, %c0_20] : memref<1x128xf32, #tpu.memory_space<vmem>>, vector<1x128xf32>
      %31 = math.log %30 : vector<1x128xf32>
      %32 = arith.addf %29, %31 : vector<1x128xf32>
      %c0_21 = arith.constant 0 : index
      %c0_22 = arith.constant 0 : index
      %33 = vector.load %arg12[%c0_21, %c0_22] : memref<1x128xf32, #tpu.memory_space<vmem>>, vector<1x128xf32>
      %34 = arith.subf %33, %32 : vector<1x128xf32>
      %c0_23 = arith.constant 0 : index
      %c0_24 = arith.constant 0 : index
      %35 = vector.load %arg7[%c0_23, %c0_24] : memref<1x128xf32, #tpu.memory_space<vmem>>, vector<1x128xf32>
      tpu.vector_store %arg7[%c0_23, %c0_24], %34 {strides = array<i32>} : memref<1x128xf32, #tpu.memory_space<vmem>>, vector<1x128xf32>,
      %c0_25 = arith.constant 0 : index
      %c0_26 = arith.constant 0 : index
      %36 = vector.load %arg13[%c0_25, %c0_26] : memref<1x128xf32, #tpu.memory_space<vmem>>, vector<1x128xf32>
      %c0_27 = arith.constant 0 : index
      %c0_28 = arith.constant 0 : index
      %37 = vector.load %arg8[%c0_27, %c0_28] : memref<1x128xf32, #tpu.memory_space<vmem>>, vector<1x128xf32>
      tpu.vector_store %arg8[%c0_27, %c0_28], %36 {strides = array<i32>} : memref<1x128xf32, #tpu.memory_space<vmem>>, vector<1x128xf32>,
    } else {
    }
    return
  }
  func.func @transform_0(%arg0: i32, %arg1: i32) -> (i32, i32) {
    %c0_i32 = arith.constant 0 : i32
    %c0_i32_0 = arith.constant 0 : i32
    return %c0_i32, %arg0 : i32, i32
  }
  func.func @transform_1(%arg0: i32, %arg1: i32) -> (i32, i32) {
    %c0_i32 = arith.constant 0 : i32
    %c0_i32_0 = arith.constant 0 : i32
    return %c0_i32, %arg0 : i32, i32
  }
  func.func @transform_2(%arg0: i32, %arg1: i32) -> (i32, i32) {
    %c0_i32 = arith.constant 0 : i32
    %c0_i32_0 = arith.constant 0 : i32
    %c0_i32_1 = arith.constant 0 : i32
    return %c0_i32, %c0_i32_0 : i32, i32
  }
  func.func @transform_3(%arg0: i32, %arg1: i32) -> (i32, i32) {
    %c0_i32 = arith.constant 0 : i32
    %c0_i32_0 = arith.constant 0 : i32
    %c0_i32_1 = arith.constant 0 : i32
    return %c0_i32, %c0_i32_0 : i32, i32
  }
  func.func @transform_4(%arg0: i32, %arg1: i32) -> (i32, i32) {
    %c0_i32 = arith.constant 0 : i32
    %c0_i32_0 = arith.constant 0 : i32
    return %arg1, %c0_i32 : i32, i32
  }
  func.func @transform_5(%arg0: i32, %arg1: i32) -> (i32, i32) {
    %c0_i32 = arith.constant 0 : i32
    %c0_i32_0 = arith.constant 0 : i32
    return %c0_i32, %arg0 : i32, i32
  }
  func.func @transform_6(%arg0: i32, %arg1: i32) -> (i32, i32) {
    %c0_i32 = arith.constant 0 : i32
    %c0_i32_0 = arith.constant 0 : i32
    return %c0_i32, %arg0 : i32, i32
  }
}

</mosaic_0001>

<llo_original>
// kernel: tpu_custom_call.1
$region0: #{tpu_custom_call.1}
  #allocation0 [shape = 'u32[]', space=smem, size = 0x4, offset = 0x4, fixed_abs, tag = 'smem constant byte address 0x4 - core index']
  #allocation1 [shape = 'u32[144,128]{1,0:T(1,128)}', space=vmem, size = 0x12000, scoped, tag = 'internal scratch']
  #allocation2 [shape = 'bf16[128,128]{1,0:T(16,128)(2,1)}', space=vmem, size = 0x8000, scoped, tag = 'scratch operand']
  #allocation3 [shape = 'f32[1,128]{1,0:T(1,128)}', space=vmem, size = 0x200, scoped, tag = 'scratch operand']
  #allocation4 [shape = 'f32[1,128]{1,0:T(1,128)}', space=vmem, size = 0x200, scoped, tag = 'scratch operand']
  #allocation5 [shape = 'f32[1,128]{1,0:T(1,128)}', space=vmem, size = 0x200, scoped, tag = 'scratch operand']
  #allocation6 [shape = 'f32[1,128]{1,0:T(1,128)}', space=vmem, size = 0x200, scoped, tag = 'scratch operand']
  %s0 = inlined_call_operand.hbm [shape: s32[1,256], index: 0, kind: input, shape index: {}]
  %s1 = inlined_call_operand.hbm [shape: bf16[128,256], index: 1, kind: input, shape index: {}]
  %s2 = inlined_call_operand.hbm [shape: bf16[128,128], index: 2, kind: input, shape index: {}]
  %s3 = inlined_call_operand.hbm [shape: f32[128,1], index: 3, kind: input, shape index: {}]
  %s4 = inlined_call_operand.hbm [shape: bf16[256,128], index: 4, kind: input, shape index: {}]
  %s5 = inlined_call_operand.hbm [shape: f32[1,256], index: 5, kind: output, shape index: {0}]
  %s6 = inlined_call_operand.hbm [shape: f32[1,256], index: 6, kind: output, shape index: {1}]
  %7 = xla_tuple %s5, %s6
  %s8 = sld [smem:[#allocation0]]
  $region97: #{tpu_custom_call.1} parent=0
    _
  %s10 = ssub.s32 1, %s8
  %s11 = scalar_select 0, %s10, %s8
  $region1: #{tpu_custom_call.1} parent=0
    #allocation7 [shape = 'u8[1024]{0}', space=vmem, size = 0x400, scoped, tag = 'input window, operand 0']
    #allocation8 [shape = 's32[2]{0}', space=sflag, size = 0x8, scoped, tag = 'scoped memory for tpu_custom_call.1']
    #allocation9 [shape = 's32[2]{0}', space=sflag, size = 0x8, scoped, tag = 'scoped memory for tpu_custom_call.1']
    #allocation10 [shape = 'u8[65536]{0}', space=vmem, size = 0x10000, scoped, tag = 'input window, operand 1']
    #allocation11 [shape = 's32[2]{0}', space=sflag, size = 0x8, scoped, tag = 'scoped memory for tpu_custom_call.1']
    #allocation12 [shape = 'u8[32768]{0}', space=vmem, size = 0x8000, scoped, tag = 'input window, operand 2, single buffered']
    #allocation13 [shape = 'u8[65536]{0}', space=vmem, size = 0x10000, scoped, tag = 'input window, operand 3, single buffered']
    #allocation14 [shape = 's32[1]{0}', space=sflag, size = 0x4, scoped, tag = 'scoped memory for tpu_custom_call.1']
    #allocation15 [shape = 'u8[65536]{0}', space=vmem, size = 0x10000, scoped, tag = 'input window, operand 4']
    #allocation16 [shape = 'u8[1024]{0}', space=vmem, size = 0x400, scoped, tag = 'output window, operand 0']
    #allocation17 [shape = 'u8[1024]{0}', space=vmem, size = 0x400, scoped, tag = 'output window, operand 1']
    #allocation18 [shape = 's32[2]{0}', space=sflag, size = 0x8, scoped, tag = 'scoped memory for tpu_custom_call.1']
    %12 = vsyncpa [#allocation8], 0
    %s13 = scalar_lea.sflag [#allocation8], 1
    %14 = vsyncpa %s13, 0
    %15 = vsyncpa [#allocation11], 0
    %s16 = scalar_lea.sflag [#allocation11], 1
    %17 = vsyncpa %s16, 0
    %18 = vsyncpa [#allocation14], 0
    %19 = vsyncpa [#allocation9], 0
    %s20 = scalar_lea.sflag [#allocation9], 1
    %21 = vsyncpa %s20, 0
    %22 = vsyncpa [#allocation18], 0
    %s23 = scalar_lea.sflag [#allocation18], 1
    %24 = vsyncpa %s23, 0
    loop: start=0, step=1, limit=6
    $region2: #{tpu_custom_call.1} parent=1 // loop_pre_header
      _
    $region3: #{tpu_custom_call.1} parent=1 // loop_header
      %s26 = sphi 0, %s30
      %p27 = scmp.ge.s32.totalorder %s26, 6
      %s33 = sphi 0, %s45
      %s34 = sphi 0, %s41
      %s35 = sphi 0, %s33
      %s36 = sphi 0, %s34
      %s37 = sphi 0, %s35
      %s38 = sphi 0, %s36
      %s48 = sphi 0, %s50
      %s51 = sphi 0, %s48
      %s52 = sphi 0, %s51
      %s68 = sphi 0, %s52
      %s74 = sphi 0, %s76
      %s77 = sphi 0, %s74
      %s78 = sphi 0, %s77
      %s94 = sphi 0, %s78
      %s98 = sphi 0, %s98
      %s100 = sphi 0, %s98
      %s101 = sphi 0, %s100
      %s115 = sphi 0, %s101
      %s119 = sphi 0, %s119
      %s121 = sphi 0, %s119
      %s122 = sphi 0, %s121
      %s136 = sphi 0, %s122
      %s142 = sphi 0, %s144
      %s145 = sphi 0, %s142
      %s146 = sphi 0, %s145
      %s162 = sphi 0, %s146
      %s168 = sphi 0, %s170
      %s171 = sphi 0, %s168
      %s172 = sphi 0, %s171
      %s188 = sphi 0, %s172
      %s194 = sphi 0, %s196
      %s197 = sphi 0, %s194
      %s198 = sphi 0, %s197
      %s214 = sphi 0, %s198
    $region4: #{tpu_custom_call.1} parent=1 // loop_header_branch
      %29 = sbr.rel (%p27) target = $region8
    $region5: #{tpu_custom_call.1} parent=1 // loop_body
      %s31 = ssub.s32 %s26, 1
      %s32 = ssub.s32 %s26, 2
      %s39 = sadd.s32 1, %s34
      %p40 = scmp.ge.s32.totalorder %s39, 2
      %s41 = scalar_select %p40, 0, %s39
      %s42 = sadd.s32 1, %s33
      %s43 = scalar_select %p40, %s42, %s33
      %p44 = scmp.ge.s32.totalorder %s43, 2
      %s45 = scalar_select %p44, 0, %s43
      %s46 = ssub.s32 %s33, %s45
      %p47 = scmp.eq.s32.totalorder %s46, 0
      %s49 = sadd.s32 %s48, 1
      %s50 = scalar_select %p47, %s48, %s49
      %p53 = pneg %p47
      %p54 = scmp.eq.s32.totalorder %s26, 3
      %p55 = por %p53, %p54
      %p56 = scmp.ne.s32.totalorder %s48, %s51
      %p57 = scmp.eq.s32.totalorder %s26, 0
      %p58 = por %p56, %p57
      %p59 = scmp.ne.s32.totalorder %s48, %s51
      %p60 = scmp.eq.s32.totalorder %s31, 3
      %p61 = por %p59, %p60
      %p62 = scmp.ne.s32.totalorder %s51, %s52
      %p63 = scmp.eq.s32.totalorder %s31, 0
      %p64 = por %p62, %p63
      %p65 = scmp.ne.s32.totalorder %s51, %s52
      %p66 = scmp.eq.s32.totalorder %s32, 3
      %p67 = por %p65, %p66
      %p69 = scmp.ne.s32.totalorder %s52, %s68
      %p70 = scmp.eq.s32.totalorder %s32, 0
      %p71 = por %p69, %p70
      %s72 = ssub.s32 %s33, %s45
      %p73 = scmp.eq.s32.totalorder %s72, 0
      %s75 = sadd.s32 %s74, 1
      %s76 = scalar_select %p73, %s74, %s75
      %p79 = pneg %p73
      %p80 = scmp.eq.s32.totalorder %s26, 3
      %p81 = por %p79, %p80
      %p82 = scmp.ne.s32.totalorder %s74, %s77
      %p83 = scmp.eq.s32.totalorder %s26, 0
      %p84 = por %p82, %p83
      %p85 = scmp.ne.s32.totalorder %s74, %s77
      %p86 = scmp.eq.s32.totalorder %s31, 3
      %p87 = por %p85, %p86
      %p88 = scmp.ne.s32.totalorder %s77, %s78
      %p89 = scmp.eq.s32.totalorder %s31, 0
      %p90 = por %p88, %p89
      %p91 = scmp.ne.s32.totalorder %s77, %s78
      %p92 = scmp.eq.s32.totalorder %s32, 3
      %p93 = por %p91, %p92
      %p95 = scmp.ne.s32.totalorder %s78, %s94
      %p96 = scmp.eq.s32.totalorder %s32, 0
      %p97 = por %p95, %p96
      %s99 = sadd.s32 %s98, 1
      %p102 = scmp.eq.s32.totalorder %s26, 3
      %p103 = scmp.ne.s32.totalorder %s98, %s100
      %p104 = scmp.eq.s32.totalorder %s26, 0
      %p105 = por %p103, %p104
      %p106 = scmp.ne.s32.totalorder %s98, %s100
      %p107 = scmp.eq.s32.totalorder %s31, 3
      %p108 = por %p106, %p107
      %p109 = scmp.ne.s32.totalorder %s100, %s101
      %p110 = scmp.eq.s32.totalorder %s31, 0
      %p111 = por %p109, %p110
      %p112 = scmp.ne.s32.totalorder %s100, %s101
      %p113 = scmp.eq.s32.totalorder %s32, 3
      %p114 = por %p112, %p113
      %p116 = scmp.ne.s32.totalorder %s101, %s115
      %p117 = scmp.eq.s32.totalorder %s32, 0
      %p118 = por %p116, %p117
      %s120 = sadd.s32 %s119, 1
      %p123 = scmp.eq.s32.totalorder %s26, 3
      %p124 = scmp.ne.s32.totalorder %s119, %s121
      %p125 = scmp.eq.s32.totalorder %s26, 0
      %p126 = por %p124, %p125
      %p127 = scmp.ne.s32.totalorder %s119, %s121
      %p128 = scmp.eq.s32.totalorder %s31, 3
      %p129 = por %p127, %p128
      %p130 = scmp.ne.s32.totalorder %s121, %s122
      %p131 = scmp.eq.s32.totalorder %s31, 0
      %p132 = por %p130, %p131
      %p133 = scmp.ne.s32.totalorder %s121, %s122
      %p134 = scmp.eq.s32.totalorder %s32, 3
      %p135 = por %p133, %p134
      %p137 = scmp.ne.s32.totalorder %s122, %s136
      %p138 = scmp.eq.s32.totalorder %s32, 0
      %p139 = por %p137, %p138
      %s140 = ssub.s32 %s34, %s41
      %p141 = scmp.eq.s32.totalorder %s140, 0
      %s143 = sadd.s32 %s142, 1
      %s144 = scalar_select %p141, %s142, %s143
      %p147 = pneg %p141
      %p148 = scmp.eq.s32.totalorder %s26, 3
      %p149 = por %p147, %p148
      %p150 = scmp.ne.s32.totalorder %s142, %s145
      %p151 = scmp.eq.s32.totalorder %s26, 0
      %p152 = por %p150, %p151
      %p153 = scmp.ne.s32.totalorder %s142, %s145
      %p154 = scmp.eq.s32.totalorder %s31, 3
      %p155 = por %p153, %p154
      %p156 = scmp.ne.s32.totalorder %s145, %s146
      %p157 = scmp.eq.s32.totalorder %s31, 0
      %p158 = por %p156, %p157
      %p159 = scmp.ne.s32.totalorder %s145, %s146
      %p160 = scmp.eq.s32.totalorder %s32, 3
      %p161 = por %p159, %p160
      %p163 = scmp.ne.s32.totalorder %s146, %s162
      %p164 = scmp.eq.s32.totalorder %s32, 0
      %p165 = por %p163, %p164
      %s166 = ssub.s32 %s33, %s45
      %p167 = scmp.eq.s32.totalorder %s166, 0
      %s169 = sadd.s32 %s168, 1
      %s170 = scalar_select %p167, %s168, %s169
      %p173 = pneg %p167
      %p174 = scmp.eq.s32.totalorder %s26, 3
      %p175 = por %p173, %p174
      %p176 = scmp.ne.s32.totalorder %s168, %s171
      %p177 = scmp.eq.s32.totalorder %s26, 0
      %p178 = por %p176, %p177
      %p179 = scmp.ne.s32.totalorder %s168, %s171
      %p180 = scmp.eq.s32.totalorder %s31, 3
      %p181 = por %p179, %p180
      %p182 = scmp.ne.s32.totalorder %s171, %s172
      %p183 = scmp.eq.s32.totalorder %s31, 0
      %p184 = por %p182, %p183
      %p185 = scmp.ne.s32.totalorder %s171, %s172
      %p186 = scmp.eq.s32.totalorder %s32, 3
      %p187 = por %p185, %p186
      %p189 = scmp.ne.s32.totalorder %s172, %s188
      %p190 = scmp.eq.s32.totalorder %s32, 0
      %p191 = por %p189, %p190
      %s192 = ssub.s32 %s33, %s45
      %p193 = scmp.eq.s32.totalorder %s192, 0
      %s195 = sadd.s32 %s194, 1
      %s196 = scalar_select %p193, %s194, %s195
      %p199 = pneg %p193
      %p200 = scmp.eq.s32.totalorder %s26, 3
      %p201 = por %p199, %p200
      %p202 = scmp.ne.s32.totalorder %s194, %s197
      %p203 = scmp.eq.s32.totalorder %s26, 0
      %p204 = por %p202, %p203
      %p205 = scmp.ne.s32.totalorder %s194, %s197
      %p206 = scmp.eq.s32.totalorder %s31, 3
      %p207 = por %p205, %p206
      %p208 = scmp.ne.s32.totalorder %s197, %s198
      %p209 = scmp.eq.s32.totalorder %s31, 0
      %p210 = por %p208, %p209
      %p211 = scmp.ne.s32.totalorder %s197, %s198
      %p212 = scmp.eq.s32.totalorder %s32, 3
      %p213 = por %p211, %p212
      %p215 = scmp.ne.s32.totalorder %s198, %s214
      %p216 = scmp.eq.s32.totalorder %s32, 0
      %p217 = por %p215, %p216
      %p218 = scmp.le.s32.totalorder 1, %s26
      %p219 = scmp.lt.s32.totalorder %s26, 5
      %p220 = pnand %p218, %p219
      %p221 = pneg %p220
      // Predicated region
      $region9: #{tpu_custom_call.1} parent=5 // pred_check
        _
      $region10: #{tpu_custom_call.1} parent=5 // pred_check_branch
        %223 = sbr.rel (%p220) target = $region12
      $region11: #{tpu_custom_call.1} parent=5 // pred_region
        %s224 = ssub.s32 %s26, 1
        // Predicated region
        $region13: #{tpu_custom_call.1} parent=11 // pred_check
          %p225 = pneg %p111
        $region14: #{tpu_custom_call.1} parent=11 // pred_check_branch
          %227 = sbr.rel (%p225) target = $region16
        $region15: #{tpu_custom_call.1} parent=11 // pred_region
          %s229 = ssub.s32 1024, 1024
          %230 = vsyncadd [#allocation11], %s229
          %s231 = sshll.u32 [#allocation12], 4
          %s232 = int_to_ptr.vmem [resolvable:$true] %s231
          %237 = dma.hbm_to_vmem [thread:$0]  %s2, 1024, %s232, [#allocation11], 64, 64, 4
        $region16: #{tpu_custom_call.1} parent=11 // pred_fallthru
          _
        // Predicated region
        $region17: #{tpu_custom_call.1} parent=11 // pred_check
          %p238 = pneg %p132
        $region18: #{tpu_custom_call.1} parent=11 // pred_check_branch
          %240 = sbr.rel (%p238) target = $region20
        $region19: #{tpu_custom_call.1} parent=11 // pred_region
          %s242 = ssub.s32 2048, 2048
          %243 = vsyncadd [#allocation14], %s242
          %s244 = sshll.u32 [#allocation13], 4
          %s245 = int_to_ptr.vmem [resolvable:$true] %s244
          %250 = dma.hbm_to_vmem [thread:$0]  %s3, 2048, %s245, [#allocation14], 128, 128, 8
        $region20: #{tpu_custom_call.1} parent=11 // pred_fallthru
          _
      $region12: #{tpu_custom_call.1} parent=5 // pred_fallthru
        _
      %p251 = scmp.lt.s32.totalorder %s26, 4
      // Predicated region
      $region21: #{tpu_custom_call.1} parent=5 // pred_check
        %p252 = pneg %p251
      $region22: #{tpu_custom_call.1} parent=5 // pred_check_branch
        %254 = sbr.rel (%p252) target = $region24
      $region23: #{tpu_custom_call.1} parent=5 // pred_region
        // Predicated region
        $region25: #{tpu_custom_call.1} parent=23 // pred_check
          %p255 = pneg %p58
        $region26: #{tpu_custom_call.1} parent=23 // pred_check_branch
          %257 = sbr.rel (%p255) target = $region28
        $region27: #{tpu_custom_call.1} parent=23 // pred_region
          %s258 = sand.u32 %s26, 1
          %s259 = scalar_lea.sflag [#allocation8], %s258
          %s260 = sand.u32 %s48, 1
          %s261 = scalar_lea.vmem [#allocation7], %s260
          %s263 = ssub.s32 16, 16
          %264 = vsyncadd %s259, %s263
          %s265 = smul.addr %s33, 16
          %s266 = scalar_lea.hbm %s0, %s265
          %s268 = sshll.u32 %s261, 4
          %s269 = int_to_ptr.vmem [resolvable:$true] %s268
          %271 = dma.hbm_to_vmem [thread:$0]  %s266, 16, %s269, %s259
        $region28: #{tpu_custom_call.1} parent=23 // pred_fallthru
          _
        // Predicated region
        $region29: #{tpu_custom_call.1} parent=23 // pred_check
          %p272 = pneg %p84
        $region30: #{tpu_custom_call.1} parent=23 // pred_check_branch
          %274 = sbr.rel (%p272) target = $region32
        $region31: #{tpu_custom_call.1} parent=23 // pred_region
          %s275 = sand.u32 %s26, 1
          %s276 = scalar_lea.sflag [#allocation11], %s275
          %s277 = sand.u32 %s74, 1
          %s278 = smul.addr %s277, 64
          %s279 = scalar_lea.vmem [#allocation10], %s278
          %s281 = ssub.s32 1024, 1024
          %282 = vsyncadd %s276, %s281
          %s283 = smul.addr %s33, 64
          %s284 = scalar_lea.hbm %s1, %s283
          %s285 = sshll.u32 %s279, 4
          %s286 = int_to_ptr.vmem [resolvable:$true] %s285
          %291 = dma.hbm_to_vmem [thread:$0]  %s284, 1024, %s286, %s276, 128, 64, 4
        $region32: #{tpu_custom_call.1} parent=23 // pred_fallthru
          _
        // Predicated region
        $region33: #{tpu_custom_call.1} parent=23 // pred_check
          %p292 = pneg %p152
        $region34: #{tpu_custom_call.1} parent=23 // pred_check_branch
          %294 = sbr.rel (%p292) target = $region36
        $region35: #{tpu_custom_call.1} parent=23 // pred_region
          %s295 = sand.u32 %s26, 1
          %s296 = scalar_lea.sflag [#allocation8], %s295
          %s297 = sand.u32 %s142, 1
          %s298 = smul.addr %s297, 64
          %s299 = scalar_lea.vmem [#allocation15], %s298
          %s300 = smul.u32 16, %s34
          %s302 = ssub.s32 1024, 1024
          %303 = vsyncadd %s296, %s302
          %s304 = smul.addr %s300, 64
          %s305 = scalar_lea.hbm %s4, %s304
          %s306 = sshll.u32 %s299, 4
          %s307 = int_to_ptr.vmem [resolvable:$true] %s306
          %312 = dma.hbm_to_vmem [thread:$0]  %s305, 1024, %s307, %s296, 64, 64, 4
        $region36: #{tpu_custom_call.1} parent=23 // pred_fallthru
          _
      $region24: #{tpu_custom_call.1} parent=5 // pred_fallthru
        _
      %p313 = scmp.le.s32.totalorder 1, %s26
      %p314 = scmp.lt.s32.totalorder %s26, 5
      %p315 = pnand %p313, %p314
      %p316 = pneg %p315
      // Predicated region
      $region37: #{tpu_custom_call.1} parent=5 // pred_check
        _
      $region38: #{tpu_custom_call.1} parent=5 // pred_check_branch
        %318 = sbr.rel (%p315) target = $region40
      $region39: #{tpu_custom_call.1} parent=5 // pred_region
        %s319 = ssub.s32 %s26, 1
        %s320 = sand.u32 %s31, 1
        %s321 = scalar_lea.sflag [#allocation8], %s320
        %s322 = sand.u32 %s51, 1
        %s323 = scalar_lea.vmem [#allocation7], %s322
        // Predicated region
        $region41: #{tpu_custom_call.1} parent=39 // pred_check
          %p324 = pneg %p64
        $region42: #{tpu_custom_call.1} parent=39 // pred_check_branch
          %326 = sbr.rel (%p324) target = $region44
        $region43: #{tpu_custom_call.1} parent=39 // pred_region
          %327 = dma.done %s321, 16
        $region44: #{tpu_custom_call.1} parent=39 // pred_fallthru
          _
        %s328 = sand.u32 %s31, 1
        %s329 = scalar_lea.sflag [#allocation11], %s328
        %s330 = sand.u32 %s77, 1
        %s331 = smul.addr %s330, 64
        %s332 = scalar_lea.vmem [#allocation10], %s331
        // Predicated region
        $region45: #{tpu_custom_call.1} parent=39 // pred_check
          %p333 = pneg %p90
        $region46: #{tpu_custom_call.1} parent=39 // pred_check_branch
          %335 = sbr.rel (%p333) target = $region48
        $region47: #{tpu_custom_call.1} parent=39 // pred_region
          %336 = dma.done %s329, 1024
        $region48: #{tpu_custom_call.1} parent=39 // pred_fallthru
          _
        // Predicated region
        $region49: #{tpu_custom_call.1} parent=39 // pred_check
          %p337 = pneg %p111
        $region50: #{tpu_custom_call.1} parent=39 // pred_check_branch
          %339 = sbr.rel (%p337) target = $region52
        $region51: #{tpu_custom_call.1} parent=39 // pred_region
          %340 = dma.done [#allocation11], 1024
        $region52: #{tpu_custom_call.1} parent=39 // pred_fallthru
          _
        // Predicated region
        $region53: #{tpu_custom_call.1} parent=39 // pred_check
          %p341 = pneg %p132
        $region54: #{tpu_custom_call.1} parent=39 // pred_check_branch
          %343 = sbr.rel (%p341) target = $region56
        $region55: #{tpu_custom_call.1} parent=39 // pred_region
          %344 = dma.done [#allocation14], 2048
        $region56: #{tpu_custom_call.1} parent=39 // pred_fallthru
          _
        %s345 = sand.u32 %s31, 1
        %s346 = scalar_lea.sflag [#allocation8], %s345
        %s347 = sand.u32 %s145, 1
        %s348 = smul.addr %s347, 64
        %s349 = scalar_lea.vmem [#allocation15], %s348
        // Predicated region
        $region57: #{tpu_custom_call.1} parent=39 // pred_check
          %p350 = pneg %p158
        $region58: #{tpu_custom_call.1} parent=39 // pred_check_branch
          %352 = sbr.rel (%p350) target = $region60
        $region59: #{tpu_custom_call.1} parent=39 // pred_region
          %353 = dma.done %s346, 1024
        $region60: #{tpu_custom_call.1} parent=39 // pred_fallthru
          _
        %s354 = sand.u32 %s31, 1
        %s355 = scalar_lea.sflag [#allocation8], %s354
        %s356 = sand.u32 %s51, 1
        %s357 = scalar_lea.vmem [#allocation7], %s356
        %p358 = pneg %p64
        %p359 = pneg %p61
        %s360 = sand.u32 %s31, 1
        %s361 = scalar_lea.sflag [#allocation11], %s360
        %s362 = sand.u32 %s77, 1
        %s363 = smul.addr %s362, 64
        %s364 = scalar_lea.vmem [#allocation10], %s363
        %p365 = pneg %p90
        %p366 = pneg %p87
        %p367 = pneg %p111
        %p368 = pneg %p108
        %p369 = pneg %p132
        %p370 = pneg %p129
        %s371 = sand.u32 %s31, 1
        %s372 = scalar_lea.sflag [#allocation8], %s371
        %s373 = sand.u32 %s145, 1
        %s374 = smul.addr %s373, 64
        %s375 = scalar_lea.vmem [#allocation15], %s374
        %p376 = pneg %p158
        %p377 = pneg %p155
        %p378 = pneg %p184
        %p379 = pneg %p181
        %s380 = sand.u32 %s171, 1
        %s381 = scalar_lea.sflag [#allocation9], %s380
        %s382 = sand.u32 %s171, 1
        %s383 = scalar_lea.vmem [#allocation16], %s382
        %p384 = pneg %p210
        %p385 = pneg %p207
        %s386 = sand.u32 %s197, 1
        %s387 = scalar_lea.sflag [#allocation18], %s386
        %s388 = sand.u32 %s197, 1
        %s389 = scalar_lea.vmem [#allocation17], %s388
        %s390 = smul.u32 16, %s36
        %p393 = scmp.eq.s32.totalorder %s36, 1
        %p394 = scmp.eq.s32.totalorder %s36, 0
        // Predicated region
        $region61: #{tpu_custom_call.1} parent=39 // pred_check
          %p395 = pneg %p394
        $region62: #{tpu_custom_call.1} parent=39 // pred_check_branch
          %397 = sbr.rel (%p395) target = $region64
        $region63: #{tpu_custom_call.1} parent=39 // pred_region
          %v398 = vld [vmem:[#allocation12] sm:$0xf]
          %v399 = vld [vmem:[#allocation12 + $0x4] sm:$0xf]
          %v400 = vld [vmem:[#allocation12 + $0x8] sm:$0xf]
          %v401 = vld [vmem:[#allocation12 + $0xc] sm:$0xf]
          %v402 = vld [vmem:[#allocation12 + $0x10] sm:$0xf]
          %v403 = vld [vmem:[#allocation12 + $0x14] sm:$0xf]
          %v404 = vld [vmem:[#allocation12 + $0x18] sm:$0xf]
          %v405 = vld [vmem:[#allocation12 + $0x1c] sm:$0xf]
          %v406 = vld [vmem:[#allocation12 + $0x20] sm:$0xf]
          %v407 = vld [vmem:[#allocation12 + $0x24] sm:$0xf]
          %v408 = vld [vmem:[#allocation12 + $0x28] sm:$0xf]
          %v409 = vld [vmem:[#allocation12 + $0x2c] sm:$0xf]
          %v410 = vld [vmem:[#allocation12 + $0x30] sm:$0xf]
          %v411 = vld [vmem:[#allocation12 + $0x34] sm:$0xf]
          %v412 = vld [vmem:[#allocation12 + $0x38] sm:$0xf]
          %v413 = vld [vmem:[#allocation12 + $0x3c] sm:$0xf]
          %v414 = vld [vmem:[%s332] sm:$0xf]
          %v415 = vld [vmem:[%s332 + $0x4] sm:$0xf]
          %v416 = vld [vmem:[%s332 + $0x8] sm:$0xf]
          %v417 = vld [vmem:[%s332 + $0xc] sm:$0xf]
          %v418 = vld [vmem:[%s332 + $0x10] sm:$0xf]
          %v419 = vld [vmem:[%s332 + $0x14] sm:$0xf]
          %v420 = vld [vmem:[%s332 + $0x18] sm:$0xf]
          %v421 = vld [vmem:[%s332 + $0x1c] sm:$0xf]
          %v422 = vld [vmem:[%s332 + $0x20] sm:$0xf]
          %v423 = vld [vmem:[%s332 + $0x24] sm:$0xf]
          %v424 = vld [vmem:[%s332 + $0x28] sm:$0xf]
          %v425 = vld [vmem:[%s332 + $0x2c] sm:$0xf]
          %v426 = vld [vmem:[%s332 + $0x30] sm:$0xf]
          %v427 = vld [vmem:[%s332 + $0x34] sm:$0xf]
          %v428 = vld [vmem:[%s332 + $0x38] sm:$0xf]
          %v429 = vld [vmem:[%s332 + $0x3c] sm:$0xf]
          %v430 = vld [vmem:[#allocation13] sm:$0xff]
          %v431 = vld [vmem:[#allocation13 + $0x8] sm:$0xff]
          %v432 = vld [vmem:[#allocation13 + $0x10] sm:$0xff]
          %v433 = vld [vmem:[#allocation13 + $0x18] sm:$0xff]
          %v434 = vld [vmem:[#allocation13 + $0x20] sm:$0xff]
          %v435 = vld [vmem:[#allocation13 + $0x28] sm:$0xff]
          %v436 = vld [vmem:[#allocation13 + $0x30] sm:$0xff]
          %v437 = vld [vmem:[#allocation13 + $0x38] sm:$0xff]
          %v438 = vld [vmem:[#allocation13 + $0x40] sm:$0xff]
          %v439 = vld [vmem:[#allocation13 + $0x48] sm:$0xff]
          %v440 = vld [vmem:[#allocation13 + $0x50] sm:$0xff]
          %v441 = vld [vmem:[#allocation13 + $0x58] sm:$0xff]
          %v442 = vld [vmem:[#allocation13 + $0x60] sm:$0xff]
          %v443 = vld [vmem:[#allocation13 + $0x68] sm:$0xff]
          %v444 = vld [vmem:[#allocation13 + $0x70] sm:$0xff]
          %v445 = vld [vmem:[#allocation13 + $0x78] sm:$0xff]
          %447 = vset.pattern.permute.xlu0 0
          %448 = vperm.xlu0 %447, %v430
          %v449 = vpop.permute.xlu0 %448
          %452 = vset.pattern.permute.xlu0 0
          %453 = vperm.xlu0 %452, %v431
          %v454 = vpop.permute.xlu0 %453
          %457 = vset.pattern.permute.xlu0 0
          %458 = vperm.xlu0 %457, %v432
          %v459 = vpop.permute.xlu0 %458
          %462 = vset.pattern.permute.xlu0 0
          %463 = vperm.xlu0 %462, %v433
          %v464 = vpop.permute.xlu0 %463
          %467 = vset.pattern.permute.xlu0 0
          %468 = vperm.xlu0 %467, %v434
          %v469 = vpop.permute.xlu0 %468
          %472 = vset.pattern.permute.xlu0 0
          %473 = vperm.xlu0 %472, %v435
          %v474 = vpop.permute.xlu0 %473
          %477 = vset.pattern.permute.xlu0 0
          %478 = vperm.xlu0 %477, %v436
          %v479 = vpop.permute.xlu0 %478
          %482 = vset.pattern.permute.xlu0 0
          %483 = vperm.xlu0 %482, %v437
          %v484 = vpop.permute.xlu0 %483
          %487 = vset.pattern.permute.xlu0 0
          %488 = vperm.xlu0 %487, %v438
          %v489 = vpop.permute.xlu0 %488
          %492 = vset.pattern.permute.xlu0 0
          %493 = vperm.xlu0 %492, %v439
          %v494 = vpop.permute.xlu0 %493
          %497 = vset.pattern.permute.xlu0 0
          %498 = vperm.xlu0 %497, %v440
          %v499 = vpop.permute.xlu0 %498
          %502 = vset.pattern.permute.xlu0 0
          %503 = vperm.xlu0 %502, %v441
          %v504 = vpop.permute.xlu0 %503
          %507 = vset.pattern.permute.xlu0 0
          %508 = vperm.xlu0 %507, %v442
          %v509 = vpop.permute.xlu0 %508
          %512 = vset.pattern.permute.xlu0 0
          %513 = vperm.xlu0 %512, %v443
          %v514 = vpop.permute.xlu0 %513
          %517 = vset.pattern.permute.xlu0 0
          %518 = vperm.xlu0 %517, %v444
          %v519 = vpop.permute.xlu0 %518
          %522 = vset.pattern.permute.xlu0 0
          %523 = vperm.xlu0 %522, %v445
          %v524 = vpop.permute.xlu0 %523
          %v542 = vunpack.c.l.b16 %v398
          %v543 = vunpack.c.l.b16 %v399
          %v544 = vunpack.c.l.b16 %v400
          %v545 = vunpack.c.l.b16 %v401
          %v546 = vunpack.c.l.b16 %v402
          %v547 = vunpack.c.l.b16 %v403
          %v548 = vunpack.c.l.b16 %v404
          %v549 = vunpack.c.l.b16 %v405
          %v550 = vunpack.c.l.b16 %v406
          %v551 = vunpack.c.l.b16 %v407
          %v552 = vunpack.c.l.b16 %v408
          %v553 = vunpack.c.l.b16 %v409
          %v554 = vunpack.c.l.b16 %v410
          %v555 = vunpack.c.l.b16 %v411
          %v556 = vunpack.c.l.b16 %v412
          %v557 = vunpack.c.l.b16 %v413
          %v558 = vpack.c.b16 %v543, %v542
          %v559 = vpack.c.b16 %v545, %v544
          %v560 = vpack.c.b16 %v547, %v546
          %v561 = vpack.c.b16 %v549, %v548
          %v562 = vpack.c.b16 %v551, %v550
          %v563 = vpack.c.b16 %v553, %v552
          %v564 = vpack.c.b16 %v555, %v554
          %v565 = vpack.c.b16 %v557, %v556
          %v590 = vunpack.c.l.b16 %v414
          %v591 = vunpack.c.l.b16 %v415
          %v592 = vunpack.c.l.b16 %v416
          %v593 = vunpack.c.l.b16 %v417
          %v594 = vunpack.c.l.b16 %v418
          %v595 = vunpack.c.l.b16 %v419
          %v596 = vunpack.c.l.b16 %v420
          %v597 = vunpack.c.l.b16 %v421
          %v598 = vunpack.c.l.b16 %v422
          %v599 = vunpack.c.l.b16 %v423
          %v600 = vunpack.c.l.b16 %v424
          %v601 = vunpack.c.l.b16 %v425
          %v602 = vunpack.c.l.b16 %v426
          %v603 = vunpack.c.l.b16 %v427
          %v604 = vunpack.c.l.b16 %v428
          %v605 = vunpack.c.l.b16 %v429
          %v606 = vpack.c.b16 %v591, %v590
          %v607 = vpack.c.b16 %v593, %v592
          %v608 = vpack.c.b16 %v595, %v594
          %v609 = vpack.c.b16 %v597, %v596
          %v610 = vpack.c.b16 %v599, %v598
          %v611 = vpack.c.b16 %v601, %v600
          %v612 = vpack.c.b16 %v603, %v602
          %v613 = vpack.c.b16 %v605, %v604
          %622 = vmatprep.subr.bf16.mxu0 0
          %623 = vmatpush1.bf16.msra.mxu0 %v606
          %624 = vmatprep.subr.bf16.mxu0 0
          %625 = vmatpush1.bf16.msra.mxu0 %v607
          %626 = vmatprep.subr.bf16.mxu0 0
          %627 = vmatpush1.bf16.msra.mxu0 %v608
          %628 = vmatprep.subr.bf16.mxu0 0
          %629 = vmatpush1.bf16.msra.mxu0 %v609
          %630 = vmatprep.subr.bf16.mxu0 0
          %631 = vmatpush1.bf16.msra.mxu0 %v610
          %632 = vmatprep.subr.bf16.mxu0 0
          %633 = vmatpush1.bf16.msra.mxu0 %v611
          %634 = vmatprep.subr.bf16.mxu0 0
          %635 = vmatpush1.bf16.msra.mxu0 %v612
          %636 = vmatprep.subr.bf16.mxu0 0
          %637 = vmatpush1.bf16.msra.mxu0 %v613
          %638 = vmatprep.subr.bf16.mxu0 0
          %639 = vmatpush1.bf16.msra.mxu0 0
          %640 = vmatprep.subr.bf16.mxu0 0
          %641 = vmatpush1.bf16.msra.mxu0 0
          %642 = vmatprep.subr.bf16.mxu0 0
          %643 = vmatpush1.bf16.msra.mxu0 0
          %644 = vmatprep.subr.bf16.mxu0 0
          %645 = vmatpush1.bf16.msra.mxu0 0
          %646 = vmatprep.subr.bf16.mxu0 0
          %647 = vmatpush1.bf16.msra.mxu0 0
          %648 = vmatprep.subr.bf16.mxu0 0
          %649 = vmatpush1.bf16.msra.mxu0 0
          %650 = vmatprep.subr.bf16.mxu0 0
          %651 = vmatpush1.bf16.msra.mxu0 0
          %652 = vmatprep.subr.bf16.mxu0 0
          %653 = vmatpush1.bf16.msra.mxu0 0
          %654 = vmatprep.mubr.bf16.mxu0 0
          %655 = vmatmul.mubr.bf16.gmra.mrb[0].mxu0 %v558
          %v656 = vpop.f32.mrb[0].mxu0
          %v657 = vadd.f32 %v449, %v656
          %v658 = vpop.f32.mrb[0].mxu0
          %v659 = vpop.f32.mrb[0].mxu0
          %v660 = vadd.f32 %v454, %v659
          %v661 = vpop.f32.mrb[0].mxu0
          %662 = vmatprep.mubr.bf16.mxu0 0
          %663 = vmatmul.mubr.bf16.gmra.mrb[0].mxu0 %v559
          %v664 = vpop.f32.mrb[0].mxu0
          %v665 = vadd.f32 %v459, %v664
          %v666 = vpop.f32.mrb[0].mxu0
          %v667 = vpop.f32.mrb[0].mxu0
          %v668 = vadd.f32 %v464, %v667
          %v669 = vpop.f32.mrb[0].mxu0
          %670 = vmatprep.mubr.bf16.mxu0 0
          %671 = vmatmul.mubr.bf16.gmra.mrb[0].mxu0 %v560
          %v672 = vpop.f32.mrb[0].mxu0
          %v673 = vadd.f32 %v469, %v672
          %v674 = vpop.f32.mrb[0].mxu0
          %v675 = vpop.f32.mrb[0].mxu0
          %v676 = vadd.f32 %v474, %v675
          %v677 = vpop.f32.mrb[0].mxu0
          %678 = vmatprep.mubr.bf16.mxu0 0
          %679 = vmatmul.mubr.bf16.gmra.mrb[0].mxu0 %v561
          %v680 = vpop.f32.mrb[0].mxu0
          %v681 = vadd.f32 %v479, %v680
          %v682 = vpop.f32.mrb[0].mxu0
          %v683 = vpop.f32.mrb[0].mxu0
          %v684 = vadd.f32 %v484, %v683
          %v685 = vpop.f32.mrb[0].mxu0
          %686 = vmatprep.mubr.bf16.mxu0 0
          %687 = vmatmul.mubr.bf16.gmra.mrb[0].mxu0 %v562
          %v688 = vpop.f32.mrb[0].mxu0
          %v689 = vadd.f32 %v489, %v688
          %v690 = vpop.f32.mrb[0].mxu0
          %v691 = vpop.f32.mrb[0].mxu0
          %v692 = vadd.f32 %v494, %v691
          %v693 = vpop.f32.mrb[0].mxu0
          %694 = vmatprep.mubr.bf16.mxu0 0
          %695 = vmatmul.mubr.bf16.gmra.mrb[0].mxu0 %v563
          %v696 = vpop.f32.mrb[0].mxu0
          %v697 = vadd.f32 %v499, %v696
          %v698 = vpop.f32.mrb[0].mxu0
          %v699 = vpop.f32.mrb[0].mxu0
          %v700 = vadd.f32 %v504, %v699
          %v701 = vpop.f32.mrb[0].mxu0
          %702 = vmatprep.mubr.bf16.mxu0 0
          %703 = vmatmul.mubr.bf16.gmra.mrb[0].mxu0 %v564
          %v704 = vpop.f32.mrb[0].mxu0
          %v705 = vadd.f32 %v509, %v704
          %v706 = vpop.f32.mrb[0].mxu0
          %v707 = vpop.f32.mrb[0].mxu0
          %v708 = vadd.f32 %v514, %v707
          %v709 = vpop.f32.mrb[0].mxu0
          %710 = vmatprep.mubr.bf16.mxu0 0
          %711 = vmatmul.mubr.bf16.gmra.mrb[0].mxu0 %v565
          %v712 = vpop.f32.mrb[0].mxu0
          %v713 = vadd.f32 %v519, %v712
          %v714 = vpop.f32.mrb[0].mxu0
          %v715 = vpop.f32.mrb[0].mxu0
          %v716 = vadd.f32 %v524, %v715
          %v717 = vpop.f32.mrb[0].mxu0
          %718 = vdwg.mxu0
          %v719 = vtanh.pop %v657
          %v720 = vtanh.pop %v660
          %v721 = vtanh.pop %v665
          %v722 = vtanh.pop %v668
          %v723 = vtanh.pop %v673
          %v724 = vtanh.pop %v676
          %v725 = vtanh.pop %v681
          %v726 = vtanh.pop %v684
          %v727 = vtanh.pop %v689
          %v728 = vtanh.pop %v692
          %v729 = vtanh.pop %v697
          %v730 = vtanh.pop %v700
          %v731 = vtanh.pop %v705
          %v732 = vtanh.pop %v708
          %v733 = vtanh.pop %v713
          %v734 = vtanh.pop %v716
          %v735 = vpack.c.bf16 %v720, %v719
          %v736 = vpack.c.bf16 %v722, %v721
          %v737 = vpack.c.bf16 %v724, %v723
          %v738 = vpack.c.bf16 %v726, %v725
          %v739 = vpack.c.bf16 %v728, %v727
          %v740 = vpack.c.bf16 %v730, %v729
          %v741 = vpack.c.bf16 %v732, %v731
          %v742 = vpack.c.bf16 %v734, %v733
          %743 = vst [vmem:[#allocation2] sm:$0xff] %v735
          %744 = vst [vmem:[#allocation2 + $0x8] sm:$0xff] %v736
          %745 = vst [vmem:[#allocation2 + $0x10] sm:$0xff] %v737
          %746 = vst [vmem:[#allocation2 + $0x18] sm:$0xff] %v738
          %747 = vst [vmem:[#allocation2 + $0x20] sm:$0xff] %v739
          %748 = vst [vmem:[#allocation2 + $0x28] sm:$0xff] %v740
          %749 = vst [vmem:[#allocation2 + $0x30] sm:$0xff] %v741
          %750 = vst [vmem:[#allocation2 + $0x38] sm:$0xff] %v742
          %751 = vst [vmem:[#allocation3] sm:$0x1] -inf
          %752 = vst [vmem:[#allocation4] sm:$0x1] 0.0
          %753 = vst [vmem:[#allocation5] sm:$0x1] 0.0
          %754 = vst [vmem:[#allocation6] sm:$0x1] 0.0
        $region64: #{tpu_custom_call.1} parent=39 // pred_fallthru
          _
        %v755 = vld [vmem:[%s349] sm:$0xf]
        %v756 = vld [vmem:[%s349 + $0x4] sm:$0xf]
        %v757 = vld [vmem:[%s349 + $0x8] sm:$0xf]
        %v758 = vld [vmem:[%s349 + $0xc] sm:$0xf]
        %v759 = vld [vmem:[%s349 + $0x10] sm:$0xf]
        %v760 = vld [vmem:[%s349 + $0x14] sm:$0xf]
        %v761 = vld [vmem:[%s349 + $0x18] sm:$0xf]
        %v762 = vld [vmem:[%s349 + $0x1c] sm:$0xf]
        %v763 = vld [vmem:[%s349 + $0x20] sm:$0xf]
        %v764 = vld [vmem:[%s349 + $0x24] sm:$0xf]
        %v765 = vld [vmem:[%s349 + $0x28] sm:$0xf]
        %v766 = vld [vmem:[%s349 + $0x2c] sm:$0xf]
        %v767 = vld [vmem:[%s349 + $0x30] sm:$0xf]
        %v768 = vld [vmem:[%s349 + $0x34] sm:$0xf]
        %v769 = vld [vmem:[%s349 + $0x38] sm:$0xf]
        %v770 = vld [vmem:[%s349 + $0x3c] sm:$0xf]
        %v771 = vld [vmem:[#allocation2] sm:$0xff]
        %v772 = vld [vmem:[#allocation2 + $0x8] sm:$0xff]
        %v773 = vld [vmem:[#allocation2 + $0x10] sm:$0xff]
        %v774 = vld [vmem:[#allocation2 + $0x18] sm:$0xff]
        %v775 = vld [vmem:[#allocation2 + $0x20] sm:$0xff]
        %v776 = vld [vmem:[#allocation2 + $0x28] sm:$0xff]
        %v777 = vld [vmem:[#allocation2 + $0x30] sm:$0xff]
        %v778 = vld [vmem:[#allocation2 + $0x38] sm:$0xff]
        %v795 = vunpack.c.l.b16 %v755
        %v796 = vunpack.c.l.b16 %v756
        %v797 = vunpack.c.l.b16 %v757
        %v798 = vunpack.c.l.b16 %v758
        %v799 = vunpack.c.l.b16 %v759
        %v800 = vunpack.c.l.b16 %v760
        %v801 = vunpack.c.l.b16 %v761
        %v802 = vunpack.c.l.b16 %v762
        %v803 = vunpack.c.l.b16 %v763
        %v804 = vunpack.c.l.b16 %v764
        %v805 = vunpack.c.l.b16 %v765
        %v806 = vunpack.c.l.b16 %v766
        %v807 = vunpack.c.l.b16 %v767
        %v808 = vunpack.c.l.b16 %v768
        %v809 = vunpack.c.l.b16 %v769
        %v810 = vunpack.c.l.b16 %v770
        %v811 = vpack.c.b16 %v796, %v795
        %v812 = vpack.c.b16 %v798, %v797
        %v813 = vpack.c.b16 %v800, %v799
        %v814 = vpack.c.b16 %v802, %v801
        %v815 = vpack.c.b16 %v804, %v803
        %v816 = vpack.c.b16 %v806, %v805
        %v817 = vpack.c.b16 %v808, %v807
        %v818 = vpack.c.b16 %v810, %v809
        %827 = vmatprep.subr.bf16.mxu0 0
        %828 = vmatpush1.bf16.msra.mxu0 %v771
        %829 = vmatprep.subr.bf16.mxu0 0
        %830 = vmatpush1.bf16.msra.mxu0 %v772
        %831 = vmatprep.subr.bf16.mxu0 0
        %832 = vmatpush1.bf16.msra.mxu0 %v773
        %833 = vmatprep.subr.bf16.mxu0 0
        %834 = vmatpush1.bf16.msra.mxu0 %v774
        %835 = vmatprep.subr.bf16.mxu0 0
        %836 = vmatpush1.bf16.msra.mxu0 %v775
        %837 = vmatprep.subr.bf16.mxu0 0
        %838 = vmatpush1.bf16.msra.mxu0 %v776
        %839 = vmatprep.subr.bf16.mxu0 0
        %840 = vmatpush1.bf16.msra.mxu0 %v777
        %841 = vmatprep.subr.bf16.mxu0 0
        %842 = vmatpush1.bf16.msra.mxu0 %v778
        %843 = vmatprep.subr.bf16.mxu0 0
        %844 = vmatpush1.bf16.msra.mxu0 0
        %845 = vmatprep.subr.bf16.mxu0 0
        %846 = vmatpush1.bf16.msra.mxu0 0
        %847 = vmatprep.subr.bf16.mxu0 0
        %848 = vmatpush1.bf16.msra.mxu0 0
        %849 = vmatprep.subr.bf16.mxu0 0
        %850 = vmatpush1.bf16.msra.mxu0 0
        %851 = vmatprep.subr.bf16.mxu0 0
        %852 = vmatpush1.bf16.msra.mxu0 0
        %853 = vmatprep.subr.bf16.mxu0 0
        %854 = vmatpush1.bf16.msra.mxu0 0
        %855 = vmatprep.subr.bf16.mxu0 0
        %856 = vmatpush1.bf16.msra.mxu0 0
        %857 = vmatprep.subr.bf16.mxu0 0
        %858 = vmatpush1.bf16.msra.mxu0 0
        %859 = vmatprep.mubr.bf16.mxu0 0
        %860 = vmatmul.mubr.bf16.gmra.mrb[0].mxu0 %v811
        %v861 = vpop.f32.mrb[0].mxu0
        %v862 = vadd.f32 0.0, %v861
        %v863 = vpop.f32.mrb[0].mxu0
        %v864 = vpop.f32.mrb[0].mxu0
        %v865 = vadd.f32 0.0, %v864
        %v866 = vpop.f32.mrb[0].mxu0
        %867 = vmatprep.mubr.bf16.mxu0 0
        %868 = vmatmul.mubr.bf16.gmra.mrb[0].mxu0 %v812
        %v869 = vpop.f32.mrb[0].mxu0
        %v870 = vadd.f32 0.0, %v869
        %v871 = vpop.f32.mrb[0].mxu0
        %v872 = vpop.f32.mrb[0].mxu0
        %v873 = vadd.f32 0.0, %v872
        %v874 = vpop.f32.mrb[0].mxu0
        %875 = vmatprep.mubr.bf16.mxu0 0
        %876 = vmatmul.mubr.bf16.gmra.mrb[0].mxu0 %v813
        %v877 = vpop.f32.mrb[0].mxu0
        %v878 = vadd.f32 0.0, %v877
        %v879 = vpop.f32.mrb[0].mxu0
        %v880 = vpop.f32.mrb[0].mxu0
        %v881 = vadd.f32 0.0, %v880
        %v882 = vpop.f32.mrb[0].mxu0
        %883 = vmatprep.mubr.bf16.mxu0 0
        %884 = vmatmul.mubr.bf16.gmra.mrb[0].mxu0 %v814
        %v885 = vpop.f32.mrb[0].mxu0
        %v886 = vadd.f32 0.0, %v885
        %v887 = vpop.f32.mrb[0].mxu0
        %v888 = vpop.f32.mrb[0].mxu0
        %v889 = vadd.f32 0.0, %v888
        %v890 = vpop.f32.mrb[0].mxu0
        %891 = vmatprep.mubr.bf16.mxu0 0
        %892 = vmatmul.mubr.bf16.gmra.mrb[0].mxu0 %v815
        %v893 = vpop.f32.mrb[0].mxu0
        %v894 = vadd.f32 0.0, %v893
        %v895 = vpop.f32.mrb[0].mxu0
        %v896 = vpop.f32.mrb[0].mxu0
        %v897 = vadd.f32 0.0, %v896
        %v898 = vpop.f32.mrb[0].mxu0
        %899 = vmatprep.mubr.bf16.mxu0 0
        %900 = vmatmul.mubr.bf16.gmra.mrb[0].mxu0 %v816
        %v901 = vpop.f32.mrb[0].mxu0
        %v902 = vadd.f32 0.0, %v901
        %v903 = vpop.f32.mrb[0].mxu0
        %v904 = vpop.f32.mrb[0].mxu0
        %v905 = vadd.f32 0.0, %v904
        %v906 = vpop.f32.mrb[0].mxu0
        %907 = vmatprep.mubr.bf16.mxu0 0
        %908 = vmatmul.mubr.bf16.gmra.mrb[0].mxu0 %v817
        %v909 = vpop.f32.mrb[0].mxu0
        %v910 = vadd.f32 0.0, %v909
        %v911 = vpop.f32.mrb[0].mxu0
        %v912 = vpop.f32.mrb[0].mxu0
        %v913 = vadd.f32 0.0, %v912
        %v914 = vpop.f32.mrb[0].mxu0
        %915 = vmatprep.mubr.bf16.mxu0 0
        %916 = vmatmul.mubr.bf16.gmra.mrb[0].mxu0 %v818
        %v917 = vpop.f32.mrb[0].mxu0
        %v918 = vadd.f32 0.0, %v917
        %v919 = vpop.f32.mrb[0].mxu0
        %v920 = vpop.f32.mrb[0].mxu0
        %v921 = vadd.f32 0.0, %v920
        %v922 = vpop.f32.mrb[0].mxu0
        %923 = vdwg.mxu0
        %s924 = smul.u32 %s36, 128
        %v925 = vlaneseq
        %v926 = vshrl.u32 %v925, 7
        %v927 = vadd.s32 %v926, 8
        %v928 = vadd.s32 %v926, 16
        %v929 = vadd.s32 %v926, 24
        %v930 = vadd.s32 %v926, 32
        %v931 = vadd.s32 %v926, 40
        %v932 = vadd.s32 %v926, 48
        %v933 = vadd.s32 %v926, 56
        %v934 = vadd.s32 %v926, 64
        %v935 = vadd.s32 %v926, 72
        %v936 = vadd.s32 %v926, 80
        %v937 = vadd.s32 %v926, 88
        %v938 = vadd.s32 %v926, 96
        %v939 = vadd.s32 %v926, 104
        %v940 = vadd.s32 %v926, 112
        %v941 = vadd.s32 %v926, 120
        %p942 = scmp.ne.s32.totalorder %s36, 1
        // Predicated region
        $region65: #{tpu_custom_call.1} parent=39 // pred_check
          %p943 = pneg %p942
        $region66: #{tpu_custom_call.1} parent=39 // pred_check_branch
          %945 = sbr.rel (%p943) target = $region68
        $region67: #{tpu_custom_call.1} parent=39 // pred_region
          %v946 = vmax.f32 %v862, %v878
          %v947 = vmax.f32 %v865, %v881
          %v948 = vmax.f32 %v870, %v886
          %v949 = vmax.f32 %v873, %v889
          %v950 = vmax.f32 %v946, %v894
          %v951 = vmax.f32 %v947, %v897
          %v952 = vmax.f32 %v948, %v902
          %v953 = vmax.f32 %v949, %v905
          %v954 = vmax.f32 %v950, %v910
          %v955 = vmax.f32 %v951, %v913
          %v956 = vmax.f32 %v952, %v918
          %v957 = vmax.f32 %v953, %v921
          %v958 = vmax.f32 %v954, %v955
          %v959 = vmax.f32 %v956, %v957
          %v960 = vmax.f32 %v958, %v959
          %v961 = vrot.slane %v960, 4
          %v962 = vmax.f32 %v960, %v961
          %v963 = vrot.slane %v962, 2
          %v964 = vmax.f32 %v962, %v963
          %v965 = vrot.slane %v964, 1
          %v966 = vmax.f32 %v964, %v965
          %v967 = vld [vmem:[#allocation3] sm:$0x1]
          %v968 = vmax.f32 %v967, %v966
          %v969 = vsub.f32 %v967, %v968
          %v970 = vmul.f32 %v969, 1.442695
          %v971 = vpow.pop %v970
          %v973 = vlaneseq
          %v974 = vshrl.u32 %v973, 7
          %v975 = vsub.s32 0, %v974
          %v976 = vrot.slane %v968, %v975
          %v978 = vsub.f32 %v862, %v976
          %v979 = vsub.f32 %v865, %v976
          %v980 = vsub.f32 %v870, %v976
          %v981 = vsub.f32 %v873, %v976
          %v982 = vsub.f32 %v878, %v976
          %v983 = vsub.f32 %v881, %v976
          %v984 = vsub.f32 %v886, %v976
          %v985 = vsub.f32 %v889, %v976
          %v986 = vsub.f32 %v894, %v976
          %v987 = vsub.f32 %v897, %v976
          %v988 = vsub.f32 %v902, %v976
          %v989 = vsub.f32 %v905, %v976
          %v990 = vsub.f32 %v910, %v976
          %v991 = vsub.f32 %v913, %v976
          %v992 = vsub.f32 %v918, %v976
          %v993 = vsub.f32 %v921, %v976
          %v994 = vmul.f32 %v978, 1.442695
          %v995 = vpow.pop %v994
          %v996 = vmul.f32 %v979, 1.442695
          %v997 = vpow.pop %v996
          %v998 = vmul.f32 %v980, 1.442695
          %v999 = vpow.pop %v998
          %v1000 = vmul.f32 %v981, 1.442695
          %v1001 = vpow.pop %v1000
          %v1002 = vmul.f32 %v982, 1.442695
          %v1003 = vpow.pop %v1002
          %v1004 = vmul.f32 %v983, 1.442695
          %v1005 = vpow.pop %v1004
          %v1006 = vmul.f32 %v984, 1.442695
          %v1007 = vpow.pop %v1006
          %v1008 = vmul.f32 %v985, 1.442695
          %v1009 = vpow.pop %v1008
          %v1010 = vmul.f32 %v986, 1.442695
          %v1011 = vpow.pop %v1010
          %v1012 = vmul.f32 %v987, 1.442695
          %v1013 = vpow.pop %v1012
          %v1014 = vmul.f32 %v988, 1.442695
          %v1015 = vpow.pop %v1014
          %v1016 = vmul.f32 %v989, 1.442695
          %v1017 = vpow.pop %v1016
          %v1018 = vmul.f32 %v990, 1.442695
          %v1019 = vpow.pop %v1018
          %v1020 = vmul.f32 %v991, 1.442695
          %v1021 = vpow.pop %v1020
          %v1022 = vmul.f32 %v992, 1.442695
          %v1023 = vpow.pop %v1022
          %v1024 = vmul.f32 %v993, 1.442695
          %v1025 = vpow.pop %v1024
          %v1026 = vpack.c.bf16 %v997, %v995
          %v1027 = vpack.c.bf16 %v1001, %v999
          %v1028 = vpack.c.bf16 %v1005, %v1003
          %v1029 = vpack.c.bf16 %v1009, %v1007
          %v1030 = vpack.c.bf16 %v1013, %v1011
          %v1031 = vpack.c.bf16 %v1017, %v1015
          %v1032 = vpack.c.bf16 %v1021, %v1019
          %v1033 = vpack.c.bf16 %v1025, %v1023
          %1034 = vmatprep.subr.bf16.mxu0 0
          %1035 = vmatpush1.bf16.msra.mxu0 %v1026
          %1036 = vmatprep.subr.bf16.mxu0 0
          %1037 = vmatpush1.bf16.msra.mxu0 %v1027
          %1038 = vmatprep.subr.bf16.mxu0 0
          %1039 = vmatpush1.bf16.msra.mxu0 %v1028
          %1040 = vmatprep.subr.bf16.mxu0 0
          %1041 = vmatpush1.bf16.msra.mxu0 %v1029
          %1042 = vmatprep.subr.bf16.mxu0 0
          %1043 = vmatpush1.bf16.msra.mxu0 %v1030
          %1044 = vmatprep.subr.bf16.mxu0 0
          %1045 = vmatpush1.bf16.msra.mxu0 %v1031
          %1046 = vmatprep.subr.bf16.mxu0 0
          %1047 = vmatpush1.bf16.msra.mxu0 %v1032
          %1048 = vmatprep.subr.bf16.mxu0 0
          %1049 = vmatpush1.bf16.msra.mxu0 %v1033
          %1050 = vmatprep.subr.bf16.mxu0 0
          %1051 = vmatpush1.bf16.msra.mxu0 0
          %1052 = vmatprep.subr.bf16.mxu0 0
          %1053 = vmatpush1.bf16.msra.mxu0 0
          %1054 = vmatprep.subr.bf16.mxu0 0
          %1055 = vmatpush1.bf16.msra.mxu0 0
          %1056 = vmatprep.subr.bf16.mxu0 0
          %1057 = vmatpush1.bf16.msra.mxu0 0
          %1058 = vmatprep.subr.bf16.mxu0 0
          %1059 = vmatpush1.bf16.msra.mxu0 0
          %1060 = vmatprep.subr.bf16.mxu0 0
          %1061 = vmatpush1.bf16.msra.mxu0 0
          %1062 = vmatprep.subr.bf16.mxu0 0
          %1063 = vmatpush1.bf16.msra.mxu0 0
          %1064 = vmatprep.subr.bf16.mxu0 0
          %1065 = vmatpush1.bf16.msra.mxu0 0
          %1066 = vmatprep.mubr.bf16.mxu0 0
          %1067 = vmatmul.mubr.bf16.gmra.mrb[0].mxu0 1065369472
          %v1068 = vpop.f32.mrb[0].mxu0
          %v1069 = vadd.f32 0.0, %v1068
          %v1070 = vpop.f32.mrb[0].mxu0
          %v1071 = vpop.f32.mrb[0].mxu0
          %v1072 = vpop.f32.mrb[0].mxu0
          %1073 = vdwg.mxu0
          %v1074 = vld [vmem:[#allocation4] sm:$0x1]
          %v1075 = vmul.f32 %v971, %v1074
          %v1076 = vadd.f32 %v1075, %v1069
          %1077 = vst [vmem:[#allocation4] sm:$0x1] %v1076
          %1078 = vst [vmem:[#allocation3] sm:$0x1] %v968
        $region68: #{tpu_custom_call.1} parent=39 // pred_fallthru
          _
        // Predicated region
        $region69: #{tpu_custom_call.1} parent=39 // pred_check
          %p1079 = pneg %p393
        $region70: #{tpu_custom_call.1} parent=39 // pred_check_branch
          %1081 = sbr.rel (%p1079) target = $region72
        $region71: #{tpu_custom_call.1} parent=39 // pred_region
          %s1082 = ssub.s32 200, %s924
          %v1083 = vstv %s1082
          %vm1084 = vcmp.lt.s32.totalorder %v926, %v1083
          %vm1085 = vcmp.lt.s32.totalorder %v927, %v1083
          %vm1086 = vcmp.lt.s32.totalorder %v928, %v1083
          %vm1087 = vcmp.lt.s32.totalorder %v929, %v1083
          %vm1088 = vcmp.lt.s32.totalorder %v930, %v1083
          %vm1089 = vcmp.lt.s32.totalorder %v931, %v1083
          %vm1090 = vcmp.lt.s32.totalorder %v932, %v1083
          %vm1091 = vcmp.lt.s32.totalorder %v933, %v1083
          %vm1092 = vcmp.lt.s32.totalorder %v934, %v1083
          %vm1093 = vcmp.lt.s32.totalorder %v935, %v1083
          %vm1094 = vcmp.lt.s32.totalorder %v936, %v1083
          %vm1095 = vcmp.lt.s32.totalorder %v937, %v1083
          %vm1096 = vcmp.lt.s32.totalorder %v938, %v1083
          %vm1097 = vcmp.lt.s32.totalorder %v939, %v1083
          %vm1098 = vcmp.lt.s32.totalorder %v940, %v1083
          %vm1099 = vcmp.lt.s32.totalorder %v941, %v1083
          %v1100 = vsel %vm1084, %v862, -inf
          %v1101 = vsel %vm1085, %v865, -inf
          %v1102 = vsel %vm1086, %v870, -inf
          %v1103 = vsel %vm1087, %v873, -inf
          %v1104 = vsel %vm1088, %v878, -inf
          %v1105 = vsel %vm1089, %v881, -inf
          %v1106 = vsel %vm1090, %v886, -inf
          %v1107 = vsel %vm1091, %v889, -inf
          %v1108 = vsel %vm1092, %v894, -inf
          %v1109 = vsel %vm1093, %v897, -inf
          %v1110 = vsel %vm1094, %v902, -inf
          %v1111 = vsel %vm1095, %v905, -inf
          %v1112 = vsel %vm1096, %v910, -inf
          %v1113 = vsel %vm1097, %v913, -inf
          %v1114 = vsel %vm1098, %v918, -inf
          %v1115 = vsel %vm1099, %v921, -inf
          %v1116 = vmax.f32 %v1100, %v1104
          %v1117 = vmax.f32 %v1101, %v1105
          %v1118 = vmax.f32 %v1102, %v1106
          %v1119 = vmax.f32 %v1103, %v1107
          %v1120 = vmax.f32 %v1116, %v1108
          %v1121 = vmax.f32 %v1117, %v1109
          %v1122 = vmax.f32 %v1118, %v1110
          %v1123 = vmax.f32 %v1119, %v1111
          %v1124 = vmax.f32 %v1120, %v1112
          %v1125 = vmax.f32 %v1121, %v1113
          %v1126 = vmax.f32 %v1122, %v1114
          %v1127 = vmax.f32 %v1123, %v1115
          %v1128 = vmax.f32 %v1124, %v1125
          %v1129 = vmax.f32 %v1126, %v1127
          %v1130 = vmax.f32 %v1128, %v1129
          %v1131 = vrot.slane %v1130, 4
          %v1132 = vmax.f32 %v1130, %v1131
          %v1133 = vrot.slane %v1132, 2
          %v1134 = vmax.f32 %v1132, %v1133
          %v1135 = vrot.slane %v1134, 1
          %v1136 = vmax.f32 %v1134, %v1135
          %v1137 = vld [vmem:[#allocation3] sm:$0x1]
          %v1138 = vmax.f32 %v1137, %v1136
          %v1139 = vsub.f32 %v1137, %v1138
          %v1140 = vmul.f32 %v1139, 1.442695
          %v1141 = vpow.pop %v1140
          %v1143 = vlaneseq
          %v1144 = vshrl.u32 %v1143, 7
          %v1145 = vsub.s32 0, %v1144
          %v1146 = vrot.slane %v1138, %v1145
          %v1148 = vsub.f32 %v1100, %v1146
          %v1149 = vsub.f32 %v1101, %v1146
          %v1150 = vsub.f32 %v1102, %v1146
          %v1151 = vsub.f32 %v1103, %v1146
          %v1152 = vsub.f32 %v1104, %v1146
          %v1153 = vsub.f32 %v1105, %v1146
          %v1154 = vsub.f32 %v1106, %v1146
          %v1155 = vsub.f32 %v1107, %v1146
          %v1156 = vsub.f32 %v1108, %v1146
          %v1157 = vsub.f32 %v1109, %v1146
          %v1158 = vsub.f32 %v1110, %v1146
          %v1159 = vsub.f32 %v1111, %v1146
          %v1160 = vsub.f32 %v1112, %v1146
          %v1161 = vsub.f32 %v1113, %v1146
          %v1162 = vsub.f32 %v1114, %v1146
          %v1163 = vsub.f32 %v1115, %v1146
          %v1164 = vmul.f32 %v1148, 1.442695
          %v1165 = vpow.pop %v1164
          %v1166 = vmul.f32 %v1149, 1.442695
          %v1167 = vpow.pop %v1166
          %v1168 = vmul.f32 %v1150, 1.442695
          %v1169 = vpow.pop %v1168
          %v1170 = vmul.f32 %v1151, 1.442695
          %v1171 = vpow.pop %v1170
          %v1172 = vmul.f32 %v1152, 1.442695
          %v1173 = vpow.pop %v1172
          %v1174 = vmul.f32 %v1153, 1.442695
          %v1175 = vpow.pop %v1174
          %v1176 = vmul.f32 %v1154, 1.442695
          %v1177 = vpow.pop %v1176
          %v1178 = vmul.f32 %v1155, 1.442695
          %v1179 = vpow.pop %v1178
          %v1180 = vmul.f32 %v1156, 1.442695
          %v1181 = vpow.pop %v1180
          %v1182 = vmul.f32 %v1157, 1.442695
          %v1183 = vpow.pop %v1182
          %v1184 = vmul.f32 %v1158, 1.442695
          %v1185 = vpow.pop %v1184
          %v1186 = vmul.f32 %v1159, 1.442695
          %v1187 = vpow.pop %v1186
          %v1188 = vmul.f32 %v1160, 1.442695
          %v1189 = vpow.pop %v1188
          %v1190 = vmul.f32 %v1161, 1.442695
          %v1191 = vpow.pop %v1190
          %v1192 = vmul.f32 %v1162, 1.442695
          %v1193 = vpow.pop %v1192
          %v1194 = vmul.f32 %v1163, 1.442695
          %v1195 = vpow.pop %v1194
          %v1196 = vpack.c.bf16 %v1167, %v1165
          %v1197 = vpack.c.bf16 %v1171, %v1169
          %v1198 = vpack.c.bf16 %v1175, %v1173
          %v1199 = vpack.c.bf16 %v1179, %v1177
          %v1200 = vpack.c.bf16 %v1183, %v1181
          %v1201 = vpack.c.bf16 %v1187, %v1185
          %v1202 = vpack.c.bf16 %v1191, %v1189
          %v1203 = vpack.c.bf16 %v1195, %v1193
          %1204 = vmatprep.subr.bf16.mxu0 0
          %1205 = vmatpush1.bf16.msra.mxu0 %v1196
          %1206 = vmatprep.subr.bf16.mxu0 0
          %1207 = vmatpush1.bf16.msra.mxu0 %v1197
          %1208 = vmatprep.subr.bf16.mxu0 0
          %1209 = vmatpush1.bf16.msra.mxu0 %v1198
          %1210 = vmatprep.subr.bf16.mxu0 0
          %1211 = vmatpush1.bf16.msra.mxu0 %v1199
          %1212 = vmatprep.subr.bf16.mxu0 0
          %1213 = vmatpush1.bf16.msra.mxu0 %v1200
          %1214 = vmatprep.subr.bf16.mxu0 0
          %1215 = vmatpush1.bf16.msra.mxu0 %v1201
          %1216 = vmatprep.subr.bf16.mxu0 0
          %1217 = vmatpush1.bf16.msra.mxu0 %v1202
          %1218 = vmatprep.subr.bf16.mxu0 0
          %1219 = vmatpush1.bf16.msra.mxu0 %v1203
          %1220 = vmatprep.subr.bf16.mxu0 0
          %1221 = vmatpush1.bf16.msra.mxu0 0
          %1222 = vmatprep.subr.bf16.mxu0 0
          %1223 = vmatpush1.bf16.msra.mxu0 0
          %1224 = vmatprep.subr.bf16.mxu0 0
          %1225 = vmatpush1.bf16.msra.mxu0 0
          %1226 = vmatprep.subr.bf16.mxu0 0
          %1227 = vmatpush1.bf16.msra.mxu0 0
          %1228 = vmatprep.subr.bf16.mxu0 0
          %1229 = vmatpush1.bf16.msra.mxu0 0
          %1230 = vmatprep.subr.bf16.mxu0 0
          %1231 = vmatpush1.bf16.msra.mxu0 0
          %1232 = vmatprep.subr.bf16.mxu0 0
          %1233 = vmatpush1.bf16.msra.mxu0 0
          %1234 = vmatprep.subr.bf16.mxu0 0
          %1235 = vmatpush1.bf16.msra.mxu0 0
          %1236 = vmatprep.mubr.bf16.mxu0 0
          %1237 = vmatmul.mubr.bf16.gmra.mrb[0].mxu0 1065369472
          %v1238 = vpop.f32.mrb[0].mxu0
          %v1239 = vadd.f32 0.0, %v1238
          %v1240 = vpop.f32.mrb[0].mxu0
          %v1241 = vpop.f32.mrb[0].mxu0
          %v1242 = vpop.f32.mrb[0].mxu0
          %1243 = vdwg.mxu0
          %v1244 = vld [vmem:[#allocation4] sm:$0x1]
          %v1245 = vmul.f32 %v1141, %v1244
          %v1246 = vadd.f32 %v1245, %v1239
          %1247 = vst [vmem:[#allocation4] sm:$0x1] %v1246
          %1248 = vst [vmem:[#allocation3] sm:$0x1] %v1138
          %vm1249 = vcmp.eq.s32.totalorder %v926, %v1083
          %vm1250 = vcmp.eq.s32.totalorder %v927, %v1083
          %vm1251 = vcmp.eq.s32.totalorder %v928, %v1083
          %vm1252 = vcmp.eq.s32.totalorder %v929, %v1083
          %vm1253 = vcmp.eq.s32.totalorder %v930, %v1083
          %vm1254 = vcmp.eq.s32.totalorder %v931, %v1083
          %vm1255 = vcmp.eq.s32.totalorder %v932, %v1083
          %vm1256 = vcmp.eq.s32.totalorder %v933, %v1083
          %vm1257 = vcmp.eq.s32.totalorder %v934, %v1083
          %vm1258 = vcmp.eq.s32.totalorder %v935, %v1083
          %vm1259 = vcmp.eq.s32.totalorder %v936, %v1083
          %vm1260 = vcmp.eq.s32.totalorder %v937, %v1083
          %vm1261 = vcmp.eq.s32.totalorder %v938, %v1083
          %vm1262 = vcmp.eq.s32.totalorder %v939, %v1083
          %vm1263 = vcmp.eq.s32.totalorder %v940, %v1083
          %vm1264 = vcmp.eq.s32.totalorder %v941, %v1083
          %v1265 = vsel %vm1249, %v862, 0.0
          %v1266 = vsel %vm1250, %v865, 0.0
          %v1267 = vsel %vm1251, %v870, 0.0
          %v1268 = vsel %vm1252, %v873, 0.0
          %v1269 = vsel %vm1253, %v878, 0.0
          %v1270 = vsel %vm1254, %v881, 0.0
          %v1271 = vsel %vm1255, %v886, 0.0
          %v1272 = vsel %vm1256, %v889, 0.0
          %v1273 = vsel %vm1257, %v894, 0.0
          %v1274 = vsel %vm1258, %v897, 0.0
          %v1275 = vsel %vm1259, %v902, 0.0
          %v1276 = vsel %vm1260, %v905, 0.0
          %v1277 = vsel %vm1261, %v910, 0.0
          %v1278 = vsel %vm1262, %v913, 0.0
          %v1279 = vsel %vm1263, %v918, 0.0
          %v1280 = vsel %vm1264, %v921, 0.0
          %v1281 = vld [vmem:[#allocation6] sm:$0x1]
          %v1282 = vpack.c.bf16 %v1266, %v1265
          %v1283 = vpack.c.bf16 %v1268, %v1267
          %v1284 = vpack.c.bf16 %v1270, %v1269
          %v1285 = vpack.c.bf16 %v1272, %v1271
          %v1286 = vpack.c.bf16 %v1274, %v1273
          %v1287 = vpack.c.bf16 %v1276, %v1275
          %v1288 = vpack.c.bf16 %v1278, %v1277
          %v1289 = vpack.c.bf16 %v1280, %v1279
          %1290 = vmatprep.subr.bf16.mxu0 0
          %1291 = vmatpush1.bf16.msra.mxu0 %v1282
          %1292 = vmatprep.subr.bf16.mxu0 0
          %1293 = vmatpush1.bf16.msra.mxu0 %v1283
          %1294 = vmatprep.subr.bf16.mxu0 0
          %1295 = vmatpush1.bf16.msra.mxu0 %v1284
          %1296 = vmatprep.subr.bf16.mxu0 0
          %1297 = vmatpush1.bf16.msra.mxu0 %v1285
          %1298 = vmatprep.subr.bf16.mxu0 0
          %1299 = vmatpush1.bf16.msra.mxu0 %v1286
          %1300 = vmatprep.subr.bf16.mxu0 0
          %1301 = vmatpush1.bf16.msra.mxu0 %v1287
          %1302 = vmatprep.subr.bf16.mxu0 0
          %1303 = vmatpush1.bf16.msra.mxu0 %v1288
          %1304 = vmatprep.subr.bf16.mxu0 0
          %1305 = vmatpush1.bf16.msra.mxu0 %v1289
          %1306 = vmatprep.subr.bf16.mxu0 0
          %1307 = vmatpush1.bf16.msra.mxu0 0
          %1308 = vmatprep.subr.bf16.mxu0 0
          %1309 = vmatpush1.bf16.msra.mxu0 0
          %1310 = vmatprep.subr.bf16.mxu0 0
          %1311 = vmatpush1.bf16.msra.mxu0 0
          %1312 = vmatprep.subr.bf16.mxu0 0
          %1313 = vmatpush1.bf16.msra.mxu0 0
          %1314 = vmatprep.subr.bf16.mxu0 0
          %1315 = vmatpush1.bf16.msra.mxu0 0
          %1316 = vmatprep.subr.bf16.mxu0 0
          %1317 = vmatpush1.bf16.msra.mxu0 0
          %1318 = vmatprep.subr.bf16.mxu0 0
          %1319 = vmatpush1.bf16.msra.mxu0 0
          %1320 = vmatprep.subr.bf16.mxu0 0
          %1321 = vmatpush1.bf16.msra.mxu0 0
          %1322 = vmatprep.mubr.bf16.mxu0 0
          %1323 = vmatmul.mubr.bf16.gmra.mrb[0].mxu0 1065369472
          %v1324 = vpop.f32.mrb[0].mxu0
          %v1325 = vadd.f32 0.0, %v1324
          %v1326 = vpop.f32.mrb[0].mxu0
          %v1327 = vpop.f32.mrb[0].mxu0
          %v1328 = vpop.f32.mrb[0].mxu0
          %1329 = vdwg.mxu0
          %v1330 = vadd.f32 %v1281, %v1325
          %1331 = vst [vmem:[#allocation6] sm:$0x1] %v1330
        $region72: #{tpu_custom_call.1} parent=39 // pred_fallthru
          _
        %v1332 = vld [vmem:[%s323] sm:$0x1]
        %v1333 = vstv %s924
        %v1334 = vsub.s32 %v1332, %v1333
        %v1335 = vlaneseq
        %v1336 = vshrl.u32 %v1335, 7
        %v1337 = vsub.s32 0, %v1336
        %v1338 = vrot.slane %v1334, %v1337
        %vm1339 = vcmp.eq.s32.totalorder %v926, %v1338
        %vm1340 = vcmp.eq.s32.totalorder %v927, %v1338
        %vm1341 = vcmp.eq.s32.totalorder %v928, %v1338
        %vm1342 = vcmp.eq.s32.totalorder %v929, %v1338
        %vm1343 = vcmp.eq.s32.totalorder %v930, %v1338
        %vm1344 = vcmp.eq.s32.totalorder %v931, %v1338
        %vm1345 = vcmp.eq.s32.totalorder %v932, %v1338
        %vm1346 = vcmp.eq.s32.totalorder %v933, %v1338
        %vm1347 = vcmp.eq.s32.totalorder %v934, %v1338
        %vm1348 = vcmp.eq.s32.totalorder %v935, %v1338
        %vm1349 = vcmp.eq.s32.totalorder %v936, %v1338
        %vm1350 = vcmp.eq.s32.totalorder %v937, %v1338
        %vm1351 = vcmp.eq.s32.totalorder %v938, %v1338
        %vm1352 = vcmp.eq.s32.totalorder %v939, %v1338
        %vm1353 = vcmp.eq.s32.totalorder %v940, %v1338
        %vm1354 = vcmp.eq.s32.totalorder %v941, %v1338
        %v1355 = vsel %vm1339, %v862, 0.0
        %v1356 = vsel %vm1340, %v865, 0.0
        %v1357 = vsel %vm1341, %v870, 0.0
        %v1358 = vsel %vm1342, %v873, 0.0
        %v1359 = vsel %vm1343, %v878, 0.0
        %v1360 = vsel %vm1344, %v881, 0.0
        %v1361 = vsel %vm1345, %v886, 0.0
        %v1362 = vsel %vm1346, %v889, 0.0
        %v1363 = vsel %vm1347, %v894, 0.0
        %v1364 = vsel %vm1348, %v897, 0.0
        %v1365 = vsel %vm1349, %v902, 0.0
        %v1366 = vsel %vm1350, %v905, 0.0
        %v1367 = vsel %vm1351, %v910, 0.0
        %v1368 = vsel %vm1352, %v913, 0.0
        %v1369 = vsel %vm1353, %v918, 0.0
        %v1370 = vsel %vm1354, %v921, 0.0
        %v1371 = vld [vmem:[#allocation5] sm:$0x1]
        %v1372 = vpack.c.bf16 %v1356, %v1355
        %v1373 = vpack.c.bf16 %v1358, %v1357
        %v1374 = vpack.c.bf16 %v1360, %v1359
        %v1375 = vpack.c.bf16 %v1362, %v1361
        %v1376 = vpack.c.bf16 %v1364, %v1363
        %v1377 = vpack.c.bf16 %v1366, %v1365
        %v1378 = vpack.c.bf16 %v1368, %v1367
        %v1379 = vpack.c.bf16 %v1370, %v1369
        %1380 = vmatprep.subr.bf16.mxu0 0
        %1381 = vmatpush1.bf16.msra.mxu0 %v1372
        %1382 = vmatprep.subr.bf16.mxu0 0
        %1383 = vmatpush1.bf16.msra.mxu0 %v1373
        %1384 = vmatprep.subr.bf16.mxu0 0
        %1385 = vmatpush1.bf16.msra.mxu0 %v1374
        %1386 = vmatprep.subr.bf16.mxu0 0
        %1387 = vmatpush1.bf16.msra.mxu0 %v1375
        %1388 = vmatprep.subr.bf16.mxu0 0
        %1389 = vmatpush1.bf16.msra.mxu0 %v1376
        %1390 = vmatprep.subr.bf16.mxu0 0
        %1391 = vmatpush1.bf16.msra.mxu0 %v1377
        %1392 = vmatprep.subr.bf16.mxu0 0
        %1393 = vmatpush1.bf16.msra.mxu0 %v1378
        %1394 = vmatprep.subr.bf16.mxu0 0
        %1395 = vmatpush1.bf16.msra.mxu0 %v1379
        %1396 = vmatprep.subr.bf16.mxu0 0
        %1397 = vmatpush1.bf16.msra.mxu0 0
        %1398 = vmatprep.subr.bf16.mxu0 0
        %1399 = vmatpush1.bf16.msra.mxu0 0
        %1400 = vmatprep.subr.bf16.mxu0 0
        %1401 = vmatpush1.bf16.msra.mxu0 0
        %1402 = vmatprep.subr.bf16.mxu0 0
        %1403 = vmatpush1.bf16.msra.mxu0 0
        %1404 = vmatprep.subr.bf16.mxu0 0
        %1405 = vmatpush1.bf16.msra.mxu0 0
        %1406 = vmatprep.subr.bf16.mxu0 0
        %1407 = vmatpush1.bf16.msra.mxu0 0
        %1408 = vmatprep.subr.bf16.mxu0 0
        %1409 = vmatpush1.bf16.msra.mxu0 0
        %1410 = vmatprep.subr.bf16.mxu0 0
        %1411 = vmatpush1.bf16.msra.mxu0 0
        %1412 = vmatprep.mubr.bf16.mxu0 0
        %1413 = vmatmul.mubr.bf16.gmra.mrb[0].mxu0 1065369472
        %v1414 = vpop.f32.mrb[0].mxu0
        %v1415 = vadd.f32 0.0, %v1414
        %v1416 = vpop.f32.mrb[0].mxu0
        %v1417 = vpop.f32.mrb[0].mxu0
        %v1418 = vpop.f32.mrb[0].mxu0
        %1419 = vdwg.mxu0
        %v1420 = vadd.f32 %v1371, %v1415
        %1421 = vst [vmem:[#allocation5] sm:$0x1] %v1420
        // Predicated region
        $region73: #{tpu_custom_call.1} parent=39 // pred_check
          %p1422 = pneg %p393
        $region74: #{tpu_custom_call.1} parent=39 // pred_check_branch
          %1424 = sbr.rel (%p1422) target = $region76
        $region75: #{tpu_custom_call.1} parent=39 // pred_region
          %v1425 = vld [vmem:[#allocation3] sm:$0x1]
          %v1426 = vld [vmem:[#allocation4] sm:$0x1]
          %v1427 = vlog2.pop %v1426
          %v1428 = vmul.f32 %v1427, 0.6931472
          %v1429 = vadd.f32 %v1425, %v1428
          %v1430 = vld [vmem:[#allocation5] sm:$0x1]
          %v1431 = vsub.f32 %v1430, %v1429
          %1432 = vst [vmem:[%s383] sm:$0x1] %v1431
          %v1433 = vld [vmem:[#allocation6] sm:$0x1]
          %1434 = vst [vmem:[%s389] sm:$0x1] %v1433
        $region76: #{tpu_custom_call.1} parent=39 // pred_fallthru
          _
        %s1435 = sand.u32 %s171, 1
        %s1436 = scalar_lea.sflag [#allocation9], %s1435
        %s1437 = sand.u32 %s171, 1
        %s1438 = scalar_lea.vmem [#allocation16], %s1437
        %s1439 = sand.u32 %s197, 1
        %s1440 = scalar_lea.sflag [#allocation18], %s1439
        %s1441 = sand.u32 %s197, 1
        %s1442 = scalar_lea.vmem [#allocation17], %s1441
        // Predicated region
        $region77: #{tpu_custom_call.1} parent=39 // pred_check
          %p1443 = pneg %p181
        $region78: #{tpu_custom_call.1} parent=39 // pred_check_branch
          %1445 = sbr.rel (%p1443) target = $region80
        $region79: #{tpu_custom_call.1} parent=39 // pred_region
          %s1447 = ssub.s32 16, 16
          %1448 = vsyncadd %s1436, %s1447
          %s1449 = smul.addr %s35, 16
          %s1450 = scalar_lea.hbm %s5, %s1449
          %s1452 = sshll.u32 %s1438, 4
          %s1453 = int_to_ptr.vmem [resolvable:$true] %s1452
          %1455 = dma.vmem_to_hbm [thread:$0]  %s1453, 16, %s1450, %s1436
        $region80: #{tpu_custom_call.1} parent=39 // pred_fallthru
          _
        // Predicated region
        $region81: #{tpu_custom_call.1} parent=39 // pred_check
          %p1456 = pneg %p207
        $region82: #{tpu_custom_call.1} parent=39 // pred_check_branch
          %1458 = sbr.rel (%p1456) target = $region84
        $region83: #{tpu_custom_call.1} parent=39 // pred_region
          %s1460 = ssub.s32 16, 16
          %1461 = vsyncadd %s1440, %s1460
          %s1462 = smul.addr %s35, 16
          %s1463 = scalar_lea.hbm %s6, %s1462
          %s1465 = sshll.u32 %s1442, 4
          %s1466 = int_to_ptr.vmem [resolvable:$true] %s1465
          %1468 = dma.vmem_to_hbm [thread:$0]  %s1466, 16, %s1463, %s1440
        $region84: #{tpu_custom_call.1} parent=39 // pred_fallthru
          _
      $region40: #{tpu_custom_call.1} parent=5 // pred_fallthru
        _
      %p1469 = scmp.le.s32.totalorder 2, %s26
      // Predicated region
      $region85: #{tpu_custom_call.1} parent=5 // pred_check
        %p1470 = pneg %p1469
      $region86: #{tpu_custom_call.1} parent=5 // pred_check_branch
        %1472 = sbr.rel (%p1470) target = $region88
      $region87: #{tpu_custom_call.1} parent=5 // pred_region
        %s1473 = ssub.s32 %s26, 2
        // Predicated region
        $region89: #{tpu_custom_call.1} parent=87 // pred_check
          %p1474 = pneg %p187
        $region90: #{tpu_custom_call.1} parent=87 // pred_check_branch
          %1476 = sbr.rel (%p1474) target = $region92
        $region91: #{tpu_custom_call.1} parent=87 // pred_region
          %s1477 = sand.u32 %s172, 1
          %s1478 = scalar_lea.sflag [#allocation9], %s1477
          %s1479 = sand.u32 %s172, 1
          %s1480 = scalar_lea.vmem [#allocation16], %s1479
          %1481 = dma.done %s1478, 16
        $region92: #{tpu_custom_call.1} parent=87 // pred_fallthru
          _
        // Predicated region
        $region93: #{tpu_custom_call.1} parent=87 // pred_check
          %p1482 = pneg %p213
        $region94: #{tpu_custom_call.1} parent=87 // pred_check_branch
          %1484 = sbr.rel (%p1482) target = $region96
        $region95: #{tpu_custom_call.1} parent=87 // pred_region
          %s1485 = sand.u32 %s198, 1
          %s1486 = scalar_lea.sflag [#allocation18], %s1485
          %s1487 = sand.u32 %s198, 1
          %s1488 = scalar_lea.vmem [#allocation17], %s1487
          %1489 = dma.done %s1486, 16
        $region96: #{tpu_custom_call.1} parent=87 // pred_fallthru
          _
      $region88: #{tpu_custom_call.1} parent=5 // pred_fallthru
        _
    $region6: #{tpu_custom_call.1} parent=1 // loop_footer
      %s30 = sadd.s32 1, %s26
    $region7: #{tpu_custom_call.1} parent=1 // loop_footer_branch
      %25 = sbr.rel target = $region3
    $region8: #{tpu_custom_call.1} parent=1 // loop_exit
      _
    %1490 = vsyncpa [#allocation8], 1
    %s1491 = scalar_lea.sflag [#allocation8], 1
    %1492 = vsyncpa %s1491, 1
    %1493 = vsyncpa [#allocation11], 1
    %s1494 = scalar_lea.sflag [#allocation11], 1
    %1495 = vsyncpa %s1494, 1
    %1496 = vsyncpa [#allocation14], 1
    %1497 = vsyncpa [#allocation9], 1
    %s1498 = scalar_lea.sflag [#allocation9], 1
    %1499 = vsyncpa %s1498, 1
    %1500 = vsyncpa [#allocation18], 1
    %s1501 = scalar_lea.sflag [#allocation18], 1
    %1502 = vsyncpa %s1501, 1

</llo_original>
